<compile_context>
chip_gen: v6e
topology: v6e:2x2x1
jax: 0.10.0
libtpu: 0.0.40
codegen_flags: <defaults>
</compile_context>

<pallas_src>
import functools
import math

import jax
import jax.numpy as jnp
import numpy as np
from jax.experimental import pallas as pl
from jax.experimental.pallas import tpu as pltpu

# ----- model hyper-parameters (small shapes consistent with the module, scaled down)
DIM = 32           # "dimension"
NHEADS = 4         # "nheads"
FFN = 64           # "dim_feedforward"
EPS = 1e-5         # "epsilon"
BATCH = 2
SEQ = 8


# ---------------------------------------------------------------------------
# Kernel: one grid step = one batch element; everything stays in VMEM/vregs.
# ---------------------------------------------------------------------------
def encoder_block_kernel(x_ref, wqkv_ref, bqkv_ref, wo_ref, w1_ref, b1_ref, w2_ref,
                         vecd_ref, o_ref, *, nheads, eps, scale, d_true):
    x = x_ref[...]                                       # (S, Dp); padded lanes are 0
    S, Dp = x.shape

    # Hoisted parameter loads.
    vecd = vecd_ref[...]                                 # (4, Dp): bo | b2 | gamma | beta
    bo, b2 = vecd[0:1, :], vecd[1:2, :]
    gamma, beta = vecd[2:3, :], vecd[3:4, :]
    b1 = b1_ref[...]                                     # (1, FFN)

    # Lane mask for the true feature lanes (padded lanes carry exact zeros).
    lane = jax.lax.broadcasted_iota(jnp.int32, (1, Dp), 1)
    fmask = (lane < d_true).astype(jnp.float32)
    inv_d = 1.0 / d_true

    def layernorm(t):
        # t is zero on padded lanes; statistics over the d_true real features only
        # (PyTorch LayerNorm: biased variance).  gamma/beta are zero on padded lanes,
        # so the output stays exactly 0 there as well.
        mu = jnp.sum(t, axis=-1, keepdims=True) * inv_d
        d = t - mu
        var = jnp.sum(d * d * fmask, axis=-1, keepdims=True) * inv_d
        return d * jax.lax.rsqrt(var + eps) * gamma + beta

    # ----- multi-head self-attention: all heads in one batched-einsum pipeline -----
    xh = jnp.broadcast_to(x, (nheads, S, Dp))            # (H, S, Dp)

    def proj(i):
        w = wqkv_ref[i]                                  # (H, Dp, dh) head-major weight
        b = bqkv_ref[i]                                  # (H, 1, dh)
        return jnp.einsum('hsd,hdf->hsf', xh, w,
                          preferred_element_type=jnp.float32) + b

    q, k, v = proj(0), proj(1), proj(2)                  # (H, S, dh) each

    s = jnp.einsum('hqf,hkf->hqk', q, k,
                   preferred_element_type=jnp.float32) * scale   # (H, S, S)
    s = s - jnp.max(s, axis=-1, keepdims=True)
    p = jnp.exp(s)
    p = p / jnp.sum(p, axis=-1, keepdims=True)           # exact softmax divide
    ctx = jnp.einsum('hqk,hkf->hqf', p, v,
                     preferred_element_type=jnp.float32)          # (H, S, dh)

    # Per-head output projection summed over heads  ==  concat(heads) @ Wo.
    attn = jnp.sum(jnp.einsum('hqf,hfd->hqd', ctx, wo_ref[...],
                              preferred_element_type=jnp.float32), axis=0) + bo   # (S, Dp)

    # dropout (p=0.1, train=False) -> identity; residual + LayerNorm.
    x1 = layernorm(attn + x)

    # ----- feed-forward network: Linear(D->FFN) -> relu -> Linear(FFN->D) -----
    h1 = jnp.maximum(jnp.dot(x1, w1_ref[...],
                             preferred_element_type=jnp.float32) + b1, 0.0)
    ff = jnp.dot(h1, w2_ref[...], preferred_element_type=jnp.float32) + b2

    # dropout -> identity; residual + LayerNorm (same LN params).
    # Single unmasked, lane-dense (S, Dp=128k) store.
    o_ref[...] = layernorm(ff + x1).astype(o_ref.dtype)


# ---------------------------------------------------------------------------
# Wrapper: constant parameter re-packing (head-major QKV/Wo, zero padding to the
# lane-dense frame) happens off the hot path; in production it would be done once.
# ---------------------------------------------------------------------------
def transformer_encoder_block(x, params, *, nheads=NHEADS, eps=EPS):
    B, S, D = x.shape
    dh = D // nheads
    scale = 1.0 / math.sqrt(dh)
    ffn = params["w1"].shape[1]

    # Lane-dense frame: pad the feature dim to a multiple of 128 (only when D < 128).
    Dp = ((D + 127) // 128) * 128
    pad = Dp - D

    def pad_rows(w):   # pad input-feature rows with zeros (no contribution)
        return jnp.pad(w, ((0, pad), (0, 0))) if pad else w

    def pad_cols(w):   # pad output-feature cols with zeros (padded lanes stay 0)
        return jnp.pad(w, ((0, 0), (0, pad))) if pad else w

    def head_major(w):        # (D, D) -> (H, Dp, dh)
        return jnp.transpose(pad_rows(w).reshape(Dp, nheads, dh), (1, 0, 2))

    def head_major_bias(b):   # (1, D) -> (H, 1, dh)
        return jnp.transpose(b.reshape(1, nheads, dh), (1, 0, 2))

    wqkv = jnp.stack([head_major(params["wq"]), head_major(params["wk"]),
                      head_major(params["wv"])])                                  # (3,H,Dp,dh)
    bqkv = jnp.stack([head_major_bias(params["bq"]), head_major_bias(params["bk"]),
                      head_major_bias(params["bv"])])                             # (3,H,1,dh)
    wo = pad_cols(params["wo"]).reshape(nheads, dh, Dp)                           # (H,dh,Dp)
    w1 = pad_rows(params["w1"])                                                   # (Dp,FFN)
    w2 = pad_cols(params["w2"])                                                   # (FFN,Dp)
    vecd = jnp.concatenate([pad_cols(params["bo"]), pad_cols(params["b2"]),
                            pad_cols(params["gamma"]), pad_cols(params["beta"])],
                           axis=0)                                                # (4,Dp)
    xp = jnp.pad(x, ((0, 0), (0, 0), (0, pad))) if pad else x                     # (B,S,Dp)

    kernel = functools.partial(encoder_block_kernel, nheads=nheads, eps=eps,
                               scale=scale, d_true=D)

    out = pl.pallas_call(
        kernel,
        out_shape=jax.ShapeDtypeStruct((B, S, Dp), x.dtype),
        grid=(B,),
        in_specs=[
            pl.BlockSpec((None, S, Dp), lambda b: (b, 0, 0)),            # x (per batch)
            pl.BlockSpec((3, nheads, Dp, dh), lambda b: (0, 0, 0, 0)),   # QKV weights
            pl.BlockSpec((3, nheads, 1, dh), lambda b: (0, 0, 0, 0)),    # QKV biases
            pl.BlockSpec((nheads, dh, Dp), lambda b: (0, 0, 0)),         # out-proj weight
            pl.BlockSpec((Dp, ffn), lambda b: (0, 0)),                   # FFN w1
            pl.BlockSpec((1, ffn), lambda b: (0, 0)),                    # FFN b1
            pl.BlockSpec((ffn, Dp), lambda b: (0, 0)),                   # FFN w2
            pl.BlockSpec((4, Dp), lambda b: (0, 0)),                     # bo|b2|gamma|beta
        ],
        out_specs=pl.BlockSpec((None, S, Dp), lambda b: (b, 0, 0)),
        compiler_params=pltpu.CompilerParams(
            dimension_semantics=("parallel",)),     # v7x: both TCs split the batch
    )(xp, wqkv, bqkv, wo, w1, b1 := params["b1"], w2, vecd)

    return out[:, :, :D]


# ---------------------------------------------------------------------------
# Pure-JAX reference (sanity check)
# ---------------------------------------------------------------------------
def reference(x, p, *, nheads=NHEADS, eps=EPS):
    def ln(v):
        mu = jnp.mean(v, -1, keepdims=True)
        var = jnp.mean((v - mu) ** 2, -1, keepdims=True)
        return (v - mu) / jnp.sqrt(var + eps) * p["gamma"] + p["beta"]

    B, S, D = x.shape
    dh = D // nheads
    q = x @ p["wq"] + p["bq"]
    k = x @ p["wk"] + p["bk"]
    v = x @ p["wv"] + p["bv"]
    q = q.reshape(B, S, nheads, dh).transpose(0, 2, 1, 3)
    k = k.reshape(B, S, nheads, dh).transpose(0, 2, 1, 3)
    v = v.reshape(B, S, nheads, dh).transpose(0, 2, 1, 3)
    s = jnp.einsum("bhqd,bhkd->bhqk", q, k) / math.sqrt(dh)
    a = jax.nn.softmax(s, axis=-1)
    o = jnp.einsum("bhqk,bhkd->bhqd", a, v).transpose(0, 2, 1, 3).reshape(B, S, D)
    o = o @ p["wo"] + p["bo"]
    x1 = ln(o + x)
    h = jnp.maximum(x1 @ p["w1"] + p["b1"], 0.0)
    ff = h @ p["w2"] + p["b2"]
    return ln(ff + x1)


def init_params(key):
    ks = jax.random.split(key, 8)
    std = 0.02
    return {
        "wq": std * jax.random.normal(ks[0], (DIM, DIM), jnp.float32),
        "wk": std * jax.random.normal(ks[1], (DIM, DIM), jnp.float32),
        "wv": std * jax.random.normal(ks[2], (DIM, DIM), jnp.float32),
        "wo": std * jax.random.normal(ks[3], (DIM, DIM), jnp.float32),
        "w1": std * jax.random.normal(ks[4], (DIM, FFN), jnp.float32),
        "w2": std * jax.random.normal(ks[5], (FFN, DIM), jnp.float32),
        "bq": 0.01 * jax.random.normal(ks[6], (1, DIM), jnp.float32),
        "bk": jnp.zeros((1, DIM), jnp.float32),
        "bv": jnp.zeros((1, DIM), jnp.float32),
        "bo": jnp.zeros((1, DIM), jnp.float32),
        "b1": 0.01 * jax.random.normal(ks[7], (1, FFN), jnp.float32),
        "b2": jnp.zeros((1, DIM), jnp.float32),
        "gamma": jnp.ones((1, DIM), jnp.float32),
        "beta": jnp.zeros((1, DIM), jnp.float32),
    }


if __name__ == "__main__":
    key = jax.random.PRNGKey(0)
    kx, kp = jax.random.split(key)
    x = jax.random.normal(kx, (BATCH, SEQ, DIM), jnp.float32)
    params = init_params(kp)

    out = transformer_encoder_block(x, params)
    out = jax.block_until_ready(out)

    ref = reference(x, params)
    # Softmax is now exact; remaining tolerance only covers MXU-vs-XLA f32 matmul
    # pass/accumulation-order differences.
    np.testing.assert_allclose(np.asarray(out), np.asarray(ref), rtol=1e-3, atol=1e-3)

    print("KERNEL_OK")
</pallas_src>

<mosaic_0001>
module attributes {stable_mosaic.version = 11 : i64} {
  func.func @encoder_block_kernel(%arg0: i32, %arg1: memref<1x8x128xf32, #tpu.memory_space<vmem>>, %arg2: memref<3x4x128x8xf32, #tpu.memory_space<vmem>>, %arg3: memref<3x4x1x8xf32, #tpu.memory_space<vmem>>, %arg4: memref<4x8x128xf32, #tpu.memory_space<vmem>>, %arg5: memref<128x64xf32, #tpu.memory_space<vmem>>, %arg6: memref<1x64xf32, #tpu.memory_space<vmem>>, %arg7: memref<64x128xf32, #tpu.memory_space<vmem>>, %arg8: memref<4x128xf32, #tpu.memory_space<vmem>>, %arg9: memref<1x8x128xf32, #tpu.memory_space<vmem>>) attributes {dimension_semantics = [#tpu.dimension_semantics<parallel>], iteration_bounds = array<i64: 2>, scalar_prefetch = 0 : i64, scratch_operands = 0 : i64, tpu.core_type = #tpu.core_type<tc>, window_params = [{transform_indices = @transform_0, window_bounds = array<i64: 1, 8, 128>}, {pipeline_mode = #tpu.pipeline_mode<synchronous>, transform_indices = @transform_1, window_bounds = array<i64: 3, 4, 128, 8>}, {pipeline_mode = #tpu.pipeline_mode<synchronous>, transform_indices = @transform_2, window_bounds = array<i64: 3, 4, 1, 8>}, {pipeline_mode = #tpu.pipeline_mode<synchronous>, transform_indices = @transform_3, window_bounds = array<i64: 4, 8, 128>}, {pipeline_mode = #tpu.pipeline_mode<synchronous>, transform_indices = @transform_4, window_bounds = array<i64: 128, 64>}, {pipeline_mode = #tpu.pipeline_mode<synchronous>, transform_indices = @transform_5, window_bounds = array<i64: 1, 64>}, {pipeline_mode = #tpu.pipeline_mode<synchronous>, transform_indices = @transform_6, window_bounds = array<i64: 64, 128>}, {pipeline_mode = #tpu.pipeline_mode<synchronous>, transform_indices = @transform_7, window_bounds = array<i64: 4, 128>}, {transform_indices = @transform_8, window_bounds = array<i64: 1, 8, 128>}]} {
    %c0 = arith.constant 0 : index
    %c0_0 = arith.constant 0 : index
    %c0_1 = arith.constant 0 : index
    %0 = vector.load %arg1[%c0, %c0_0, %c0_1] : memref<1x8x128xf32, #tpu.memory_space<vmem>>, vector<1x8x128xf32>
    %1 = vector.shape_cast %0 : vector<1x8x128xf32> to vector<8x128xf32>
    %c0_2 = arith.constant 0 : index
    %c0_3 = arith.constant 0 : index
    %2 = vector.load %arg8[%c0_2, %c0_3] : memref<4x128xf32, #tpu.memory_space<vmem>>, vector<4x128xf32>
    %3 = vector.extract_strided_slice %2 {offsets = [0, 0], sizes = [1, 128], strides = [1, 1]} : vector<4x128xf32> to vector<1x128xf32>
    %4 = vector.extract_strided_slice %2 {offsets = [1, 0], sizes = [1, 128], strides = [1, 1]} : vector<4x128xf32> to vector<1x128xf32>
    %5 = vector.extract_strided_slice %2 {offsets = [2, 0], sizes = [1, 128], strides = [1, 1]} : vector<4x128xf32> to vector<1x128xf32>
    %6 = vector.extract_strided_slice %2 {offsets = [3, 0], sizes = [1, 128], strides = [1, 1]} : vector<4x128xf32> to vector<1x128xf32>
    %c0_4 = arith.constant 0 : index
    %c0_5 = arith.constant 0 : index
    %7 = vector.load %arg6[%c0_4, %c0_5] : memref<1x64xf32, #tpu.memory_space<vmem>>, vector<1x64xf32>
    %8 = tpu.iota {dimensions = array<i32: 1>} : vector<1x128xi32>
    %c32_i32 = arith.constant 32 : i32
    %9 = vector.broadcast %c32_i32 : i32 to vector<1x128xi32>
    %10 = arith.cmpi slt, %8, %9 : vector<1x128xi32>
    %11 = arith.extui %10 : vector<1x128xi1> to vector<1x128xi32>
    %12 = arith.sitofp %11 : vector<1x128xi32> to vector<1x128xf32>
    %13 = vector.shape_cast %1 : vector<8x128xf32> to vector<1x8x128xf32>
    %14 = vector.broadcast %13 : vector<1x8x128xf32> to vector<4x8x128xf32>
    %c0_6 = arith.constant 0 : index
    %c0_7 = arith.constant 0 : index
    %c0_8 = arith.constant 0 : index
    %c0_9 = arith.constant 0 : index
    %15 = vector.load %arg2[%c0_6, %c0_7, %c0_8, %c0_9] : memref<3x4x128x8xf32, #tpu.memory_space<vmem>>, vector<1x4x128x8xf32>
    %16 = vector.shape_cast %15 : vector<1x4x128x8xf32> to vector<4x128x8xf32>
    %c0_10 = arith.constant 0 : index
    %c0_11 = arith.constant 0 : index
    %c0_12 = arith.constant 0 : index
    %c0_13 = arith.constant 0 : index
    %17 = vector.load %arg3[%c0_10, %c0_11, %c0_12, %c0_13] : memref<3x4x1x8xf32, #tpu.memory_space<vmem>>, vector<1x4x1x8xf32>
    %18 = vector.shape_cast %17 : vector<1x4x1x8xf32> to vector<4x1x8xf32>
    "tpu.trace_start"() <{level = 10 : i32, message = "hsd,hdf->hsf"}> : () -> ()
    %cst = arith.constant dense<0.000000e+00> : vector<4x8x8xf32>
    %19 = tpu.matmul %14, %16, %cst {dimension_numbers = #tpu.dot_dimension_numbers<[2], [1], [1], [2], [0, 0, 0, 1, 1, 2], [0], [0]>} : vector<4x8x128xf32>, vector<4x128x8xf32>, vector<4x8x8xf32> -> vector<4x8x8xf32>
    "tpu.trace_stop"() : () -> ()
    %20 = vector.broadcast %18 : vector<4x1x8xf32> to vector<4x8x8xf32>
    %21 = arith.addf %19, %20 : vector<4x8x8xf32>
    %c1 = arith.constant 1 : index
    %c0_14 = arith.constant 0 : index
    %c0_15 = arith.constant 0 : index
    %c0_16 = arith.constant 0 : index
    %22 = vector.load %arg2[%c1, %c0_14, %c0_15, %c0_16] : memref<3x4x128x8xf32, #tpu.memory_space<vmem>>, vector<1x4x128x8xf32>
    %23 = vector.shape_cast %22 : vector<1x4x128x8xf32> to vector<4x128x8xf32>
    %c1_17 = arith.constant 1 : index
    %c0_18 = arith.constant 0 : index
    %c0_19 = arith.constant 0 : index
    %c0_20 = arith.constant 0 : index
    %24 = vector.load %arg3[%c1_17, %c0_18, %c0_19, %c0_20] : memref<3x4x1x8xf32, #tpu.memory_space<vmem>>, vector<1x4x1x8xf32>
    %25 = vector.shape_cast %24 : vector<1x4x1x8xf32> to vector<4x1x8xf32>
    "tpu.trace_start"() <{level = 10 : i32, message = "hsd,hdf->hsf"}> : () -> ()
    %cst_21 = arith.constant dense<0.000000e+00> : vector<4x8x8xf32>
    %26 = tpu.matmul %14, %23, %cst_21 {dimension_numbers = #tpu.dot_dimension_numbers<[2], [1], [1], [2], [0, 0, 0, 1, 1, 2], [0], [0]>} : vector<4x8x128xf32>, vector<4x128x8xf32>, vector<4x8x8xf32> -> vector<4x8x8xf32>
    "tpu.trace_stop"() : () -> ()
    %27 = vector.broadcast %25 : vector<4x1x8xf32> to vector<4x8x8xf32>
    %28 = arith.addf %26, %27 : vector<4x8x8xf32>
    %c2 = arith.constant 2 : index
    %c0_22 = arith.constant 0 : index
    %c0_23 = arith.constant 0 : index
    %c0_24 = arith.constant 0 : index
    %29 = vector.load %arg2[%c2, %c0_22, %c0_23, %c0_24] : memref<3x4x128x8xf32, #tpu.memory_space<vmem>>, vector<1x4x128x8xf32>
    %30 = vector.shape_cast %29 : vector<1x4x128x8xf32> to vector<4x128x8xf32>
    %c2_25 = arith.constant 2 : index
    %c0_26 = arith.constant 0 : index
    %c0_27 = arith.constant 0 : index
    %c0_28 = arith.constant 0 : index
    %31 = vector.load %arg3[%c2_25, %c0_26, %c0_27, %c0_28] : memref<3x4x1x8xf32, #tpu.memory_space<vmem>>, vector<1x4x1x8xf32>
    %32 = vector.shape_cast %31 : vector<1x4x1x8xf32> to vector<4x1x8xf32>
    "tpu.trace_start"() <{level = 10 : i32, message = "hsd,hdf->hsf"}> : () -> ()
    %cst_29 = arith.constant dense<0.000000e+00> : vector<4x8x8xf32>
    %33 = tpu.matmul %14, %30, %cst_29 {dimension_numbers = #tpu.dot_dimension_numbers<[2], [1], [1], [2], [0, 0, 0, 1, 1, 2], [0], [0]>} : vector<4x8x128xf32>, vector<4x128x8xf32>, vector<4x8x8xf32> -> vector<4x8x8xf32>
    "tpu.trace_stop"() : () -> ()
    %34 = vector.broadcast %32 : vector<4x1x8xf32> to vector<4x8x8xf32>
    %35 = arith.addf %33, %34 : vector<4x8x8xf32>
    "tpu.trace_start"() <{level = 10 : i32, message = "hqf,hkf->hqk"}> : () -> ()
    %cst_30 = arith.constant dense<0.000000e+00> : vector<4x8x8xf32>
    %36 = tpu.matmul %21, %28, %cst_30 {dimension_numbers = #tpu.dot_dimension_numbers<[2], [2], [1], [1], [0, 0, 0, 1, 1, 1], [0], [0]>} : vector<4x8x8xf32>, vector<4x8x8xf32>, vector<4x8x8xf32> -> vector<4x8x8xf32>
    "tpu.trace_stop"() : () -> ()
    %cst_31 = arith.constant 0.353553385 : f32
    %37 = vector.broadcast %cst_31 : f32 to vector<4x8x8xf32>
    %38 = arith.mulf %36, %37 : vector<4x8x8xf32>
    %cst_32 = arith.constant dense<0xFF800000> : vector<4x8xf32>
    %39 = vector.multi_reduction <maximumf>, %38, %cst_32 [2] : vector<4x8x8xf32> to vector<4x8xf32>
    %40 = vector.shape_cast %39 : vector<4x8xf32> to vector<4x8x1xf32>
    %41 = vector.broadcast %40 : vector<4x8x1xf32> to vector<4x8x8xf32>
    %42 = arith.subf %38, %41 : vector<4x8x8xf32>
    %43 = math.exp %42 : vector<4x8x8xf32>
    %cst_33 = arith.constant dense<0.000000e+00> : vector<4x8xf32>
    %44 = vector.multi_reduction <add>, %43, %cst_33 [2] : vector<4x8x8xf32> to vector<4x8xf32>
    %45 = vector.shape_cast %44 : vector<4x8xf32> to vector<4x8x1xf32>
    %46 = vector.broadcast %45 : vector<4x8x1xf32> to vector<4x8x8xf32>
    %47 = arith.divf %43, %46 : vector<4x8x8xf32>
    "tpu.trace_start"() <{level = 10 : i32, message = "hqk,hkf->hqf"}> : () -> ()
    %cst_34 = arith.constant dense<0.000000e+00> : vector<4x8x8xf32>
    %48 = tpu.matmul %47, %35, %cst_34 {dimension_numbers = #tpu.dot_dimension_numbers<[2], [1], [1], [2], [0, 0, 0, 1, 1, 2], [0], [0]>} : vector<4x8x8xf32>, vector<4x8x8xf32>, vector<4x8x8xf32> -> vector<4x8x8xf32>
    "tpu.trace_stop"() : () -> ()
    %c0_35 = arith.constant 0 : index
    %c0_36 = arith.constant 0 : index
    %c0_37 = arith.constant 0 : index
    %49 = vector.load %arg4[%c0_35, %c0_36, %c0_37] : memref<4x8x128xf32, #tpu.memory_space<vmem>>, vector<4x8x128xf32>
    "tpu.trace_start"() <{level = 10 : i32, message = "hqf,hfd->hqd"}> : () -> ()
    %cst_38 = arith.constant dense<0.000000e+00> : vector<4x8x128xf32>
    %50 = tpu.matmul %48, %49, %cst_38 {dimension_numbers = #tpu.dot_dimension_numbers<[2], [1], [1], [2], [0, 0, 0, 1, 1, 2], [0], [0]>} : vector<4x8x8xf32>, vector<4x8x128xf32>, vector<4x8x128xf32> -> vector<4x8x128xf32>
    "tpu.trace_stop"() : () -> ()
    %cst_39 = arith.constant dense<0.000000e+00> : vector<8x128xf32>
    %51 = vector.multi_reduction <add>, %50, %cst_39 [0] : vector<4x8x128xf32> to vector<8x128xf32>
    %52 = vector.broadcast %3 : vector<1x128xf32> to vector<8x128xf32>
    %53 = arith.addf %51, %52 : vector<8x128xf32>
    %54 = arith.addf %53, %1 : vector<8x128xf32>
    %cst_40 = arith.constant dense<0.000000e+00> : vector<8xf32>
    %55 = vector.multi_reduction <add>, %54, %cst_40 [1] : vector<8x128xf32> to vector<8xf32>
    %56 = vector.shape_cast %55 : vector<8xf32> to vector<8x1xf32>
    %cst_41 = arith.constant 3.125000e-02 : f32
    %57 = vector.broadcast %cst_41 : f32 to vector<8x1xf32>
    %58 = arith.mulf %56, %57 : vector<8x1xf32>
    %59 = vector.broadcast %58 : vector<8x1xf32> to vector<8x128xf32>
    %60 = arith.subf %54, %59 : vector<8x128xf32>
    %61 = arith.mulf %60, %60 : vector<8x128xf32>
    %62 = vector.broadcast %12 : vector<1x128xf32> to vector<8x128xf32>
    %63 = arith.mulf %61, %62 : vector<8x128xf32>
    %cst_42 = arith.constant dense<0.000000e+00> : vector<8xf32>
    %64 = vector.multi_reduction <add>, %63, %cst_42 [1] : vector<8x128xf32> to vector<8xf32>
    %65 = vector.shape_cast %64 : vector<8xf32> to vector<8x1xf32>
    %cst_43 = arith.constant 3.125000e-02 : f32
    %66 = vector.broadcast %cst_43 : f32 to vector<8x1xf32>
    %67 = arith.mulf %65, %66 : vector<8x1xf32>
    %cst_44 = arith.constant 9.99999974E-6 : f32
    %68 = vector.broadcast %cst_44 : f32 to vector<8x1xf32>
    %69 = arith.addf %67, %68 : vector<8x1xf32>
    %70 = math.rsqrt %69 : vector<8x1xf32>
    %71 = vector.broadcast %70 : vector<8x1xf32> to vector<8x128xf32>
    %72 = arith.mulf %60, %71 : vector<8x128xf32>
    %73 = vector.broadcast %5 : vector<1x128xf32> to vector<8x128xf32>
    %74 = arith.mulf %72, %73 : vector<8x128xf32>
    %75 = vector.broadcast %6 : vector<1x128xf32> to vector<8x128xf32>
    %76 = arith.addf %74, %75 : vector<8x128xf32>
    %c0_45 = arith.constant 0 : index
    %c0_46 = arith.constant 0 : index
    %77 = vector.load %arg5[%c0_45, %c0_46] : memref<128x64xf32, #tpu.memory_space<vmem>>, vector<128x64xf32>
    %cst_47 = arith.constant dense<0.000000e+00> : vector<8x64xf32>
    %78 = tpu.matmul %76, %77, %cst_47 {dimension_numbers = #tpu.dot_dimension_numbers<[1], [0], [0], [1], [0, 0, 1, 1], [], []>} : vector<8x128xf32>, vector<128x64xf32>, vector<8x64xf32> -> vector<8x64xf32>
    %79 = vector.broadcast %7 : vector<1x64xf32> to vector<8x64xf32>
    %80 = arith.addf %78, %79 : vector<8x64xf32>
    %cst_48 = arith.constant 0.000000e+00 : f32
    %81 = vector.broadcast %cst_48 : f32 to vector<8x64xf32>
    %82 = arith.maximumf %80, %81 : vector<8x64xf32>
    %c0_49 = arith.constant 0 : index
    %c0_50 = arith.constant 0 : index
    %83 = vector.load %arg7[%c0_49, %c0_50] : memref<64x128xf32, #tpu.memory_space<vmem>>, vector<64x128xf32>
    %cst_51 = arith.constant dense<0.000000e+00> : vector<8x128xf32>
    %84 = tpu.matmul %82, %83, %cst_51 {dimension_numbers = #tpu.dot_dimension_numbers<[1], [0], [0], [1], [0, 0, 1, 1], [], []>} : vector<8x64xf32>, vector<64x128xf32>, vector<8x128xf32> -> vector<8x128xf32>
    %85 = vector.broadcast %4 : vector<1x128xf32> to vector<8x128xf32>
    %86 = arith.addf %84, %85 : vector<8x128xf32>
    %87 = arith.addf %86, %76 : vector<8x128xf32>
    %cst_52 = arith.constant dense<0.000000e+00> : vector<8xf32>
    %88 = vector.multi_reduction <add>, %87, %cst_52 [1] : vector<8x128xf32> to vector<8xf32>
    %89 = vector.shape_cast %88 : vector<8xf32> to vector<8x1xf32>
    %cst_53 = arith.constant 3.125000e-02 : f32
    %90 = vector.broadcast %cst_53 : f32 to vector<8x1xf32>
    %91 = arith.mulf %89, %90 : vector<8x1xf32>
    %92 = vector.broadcast %91 : vector<8x1xf32> to vector<8x128xf32>
    %93 = arith.subf %87, %92 : vector<8x128xf32>
    %94 = arith.mulf %93, %93 : vector<8x128xf32>
    %95 = vector.broadcast %12 : vector<1x128xf32> to vector<8x128xf32>
    %96 = arith.mulf %94, %95 : vector<8x128xf32>
    %cst_54 = arith.constant dense<0.000000e+00> : vector<8xf32>
    %97 = vector.multi_reduction <add>, %96, %cst_54 [1] : vector<8x128xf32> to vector<8xf32>
    %98 = vector.shape_cast %97 : vector<8xf32> to vector<8x1xf32>
    %cst_55 = arith.constant 3.125000e-02 : f32
    %99 = vector.broadcast %cst_55 : f32 to vector<8x1xf32>
    %100 = arith.mulf %98, %99 : vector<8x1xf32>
    %cst_56 = arith.constant 9.99999974E-6 : f32
    %101 = vector.broadcast %cst_56 : f32 to vector<8x1xf32>
    %102 = arith.addf %100, %101 : vector<8x1xf32>
    %103 = math.rsqrt %102 : vector<8x1xf32>
    %104 = vector.broadcast %103 : vector<8x1xf32> to vector<8x128xf32>
    %105 = arith.mulf %93, %104 : vector<8x128xf32>
    %106 = vector.broadcast %5 : vector<1x128xf32> to vector<8x128xf32>
    %107 = arith.mulf %105, %106 : vector<8x128xf32>
    %108 = vector.broadcast %6 : vector<1x128xf32> to vector<8x128xf32>
    %109 = arith.addf %107, %108 : vector<8x128xf32>
    %c0_57 = arith.constant 0 : index
    %c0_58 = arith.constant 0 : index
    %c0_59 = arith.constant 0 : index
    %110 = vector.load %arg9[%c0_57, %c0_58, %c0_59] : memref<1x8x128xf32, #tpu.memory_space<vmem>>, vector<1x8x128xf32>
    %111 = vector.shape_cast %110 : vector<1x8x128xf32> to vector<8x128xf32>
    %112 = vector.shape_cast %109 : vector<8x128xf32> to vector<1x8x128xf32>
    tpu.vector_store %arg9[%c0_57, %c0_58, %c0_59], %112 {strides = array<i32>} : memref<1x8x128xf32, #tpu.memory_space<vmem>>, vector<1x8x128xf32>,
    return
  }
  func.func @transform_0(%arg0: i32) -> (i32, i32, i32) {
    %c0_i32 = arith.constant 0 : i32
    %c0_i32_0 = arith.constant 0 : i32
    %c0_i32_1 = arith.constant 0 : i32
    return %arg0, %c0_i32, %c0_i32_0 : i32, i32, i32
  }
  func.func @transform_1(%arg0: i32) -> (i32, i32, i32, i32) {
    %c0_i32 = arith.constant 0 : i32
    %c0_i32_0 = arith.constant 0 : i32
    %c0_i32_1 = arith.constant 0 : i32
    %c0_i32_2 = arith.constant 0 : i32
    %c0_i32_3 = arith.constant 0 : i32
    return %c0_i32, %c0_i32_0, %c0_i32_1, %c0_i32_2 : i32, i32, i32, i32
  }
  func.func @transform_2(%arg0: i32) -> (i32, i32, i32, i32) {
    %c0_i32 = arith.constant 0 : i32
    %c0_i32_0 = arith.constant 0 : i32
    %c0_i32_1 = arith.constant 0 : i32
    %c0_i32_2 = arith.constant 0 : i32
    %c0_i32_3 = arith.constant 0 : i32
    return %c0_i32, %c0_i32_0, %c0_i32_1, %c0_i32_2 : i32, i32, i32, i32
  }
  func.func @transform_3(%arg0: i32) -> (i32, i32, i32) {
    %c0_i32 = arith.constant 0 : i32
    %c0_i32_0 = arith.constant 0 : i32
    %c0_i32_1 = arith.constant 0 : i32
    %c0_i32_2 = arith.constant 0 : i32
    return %c0_i32, %c0_i32_0, %c0_i32_1 : i32, i32, i32
  }
  func.func @transform_4(%arg0: i32) -> (i32, i32) {
    %c0_i32 = arith.constant 0 : i32
    %c0_i32_0 = arith.constant 0 : i32
    %c0_i32_1 = arith.constant 0 : i32
    return %c0_i32, %c0_i32_0 : i32, i32
  }
  func.func @transform_5(%arg0: i32) -> (i32, i32) {
    %c0_i32 = arith.constant 0 : i32
    %c0_i32_0 = arith.constant 0 : i32
    %c0_i32_1 = arith.constant 0 : i32
    return %c0_i32, %c0_i32_0 : i32, i32
  }
  func.func @transform_6(%arg0: i32) -> (i32, i32) {
    %c0_i32 = arith.constant 0 : i32
    %c0_i32_0 = arith.constant 0 : i32
    %c0_i32_1 = arith.constant 0 : i32
    return %c0_i32, %c0_i32_0 : i32, i32
  }
  func.func @transform_7(%arg0: i32) -> (i32, i32) {
    %c0_i32 = arith.constant 0 : i32
    %c0_i32_0 = arith.constant 0 : i32
    %c0_i32_1 = arith.constant 0 : i32
    return %c0_i32, %c0_i32_0 : i32, i32
  }
  func.func @transform_8(%arg0: i32) -> (i32, i32, i32) {
    %c0_i32 = arith.constant 0 : i32
    %c0_i32_0 = arith.constant 0 : i32
    %c0_i32_1 = arith.constant 0 : i32
    return %arg0, %c0_i32, %c0_i32_0 : i32, i32, i32
  }
}

</mosaic_0001>

<llo_original>
// kernel: tpu_custom_call.1
$region0: #{tpu_custom_call.1}
  #allocation0 [shape = 'u32[]', space=smem, size = 0x4, offset = 0x4, fixed_abs, tag = 'smem constant byte address 0x4 - core index']
  #allocation1 [shape = 'u32[144,128]{1,0:T(1,128)}', space=vmem, size = 0x12000, scoped, tag = 'internal scratch']
  %s0 = inlined_call_operand.vmem [shape: f32[2,8,128], index: 0, kind: input, shape index: {}]
  %s1 = inlined_call_operand.vmem [shape: f32[3,4,128,8], index: 1, kind: input, shape index: {}]
  %s2 = inlined_call_operand.vmem [shape: f32[3,4,1,8], index: 2, kind: input, shape index: {}]
  %s3 = inlined_call_operand.vmem [shape: f32[4,8,128], index: 3, kind: input, shape index: {}]
  %s4 = inlined_call_operand.vmem [shape: f32[128,64], index: 4, kind: input, shape index: {}]
  %s5 = inlined_call_operand.vmem [shape: f32[1,64], index: 5, kind: input, shape index: {}]
  %s6 = inlined_call_operand.vmem [shape: f32[64,128], index: 6, kind: input, shape index: {}]
  %s7 = inlined_call_operand.vmem [shape: f32[4,128], index: 7, kind: input, shape index: {}]
  %s8 = inlined_call_operand.hbm [shape: f32[2,8,128], index: 8, kind: output, shape index: {}]
  %s9 = sld [smem:[#allocation0]]
  $region65: #{tpu_custom_call.1} parent=0
    _
  %s11 = ssub.s32 1, %s9
  %s12 = scalar_select 0, %s11, %s9
  $region1: #{tpu_custom_call.1} parent=0
    #allocation2 [shape = 'u8[8192]{0}', space=vmem, size = 0x2000, scoped, tag = 'output window, operand 0']
    #allocation3 [shape = 's32[2]{0}', space=sflag, size = 0x8, scoped, tag = 'scoped memory for tpu_custom_call.1']
    %13 = vsyncpa [#allocation3], 0
    %s14 = scalar_lea.sflag [#allocation3], 1
    %15 = vsyncpa %s14, 0
    loop: start=0, step=1, limit=4
    $region2: #{tpu_custom_call.1} parent=1 // loop_pre_header
      _
    $region3: #{tpu_custom_call.1} parent=1 // loop_header
      %s17 = sphi 0, %s21
      %p18 = scmp.ge.s32.totalorder %s17, 4
      %s27 = sphi 0, %s29
      %s30 = sphi 0, %s27
      %s31 = sphi 0, %s30
      %s47 = sphi 0, %s31
      %s51 = sphi 0, %s51
      %s53 = sphi 0, %s51
      %s54 = sphi 0, %s53
      %s68 = sphi 0, %s54
      %s72 = sphi 0, %s72
      %s74 = sphi 0, %s72
      %s75 = sphi 0, %s74
      %s89 = sphi 0, %s75
      %s93 = sphi 0, %s93
      %s95 = sphi 0, %s93
      %s96 = sphi 0, %s95
      %s110 = sphi 0, %s96
      %s114 = sphi 0, %s114
      %s116 = sphi 0, %s114
      %s117 = sphi 0, %s116
      %s131 = sphi 0, %s117
      %s135 = sphi 0, %s135
      %s137 = sphi 0, %s135
      %s138 = sphi 0, %s137
      %s152 = sphi 0, %s138
      %s156 = sphi 0, %s156
      %s158 = sphi 0, %s156
      %s159 = sphi 0, %s158
      %s173 = sphi 0, %s159
      %s177 = sphi 0, %s177
      %s179 = sphi 0, %s177
      %s180 = sphi 0, %s179
      %s194 = sphi 0, %s180
      %s200 = sphi 0, %s202
      %s203 = sphi 0, %s200
      %s204 = sphi 0, %s203
      %s220 = sphi 0, %s204
    $region4: #{tpu_custom_call.1} parent=1 // loop_header_branch
      %20 = sbr.rel (%p18) target = $region8
    $region5: #{tpu_custom_call.1} parent=1 // loop_body
      %s22 = ssub.s32 %s17, 1
      %s23 = ssub.s32 %s17, 2
      %s24 = sadd.s32 %s17, 1
      %s25 = ssub.s32 %s17, %s24
      %p26 = scmp.eq.s32.totalorder %s25, 0
      %s28 = sadd.s32 %s27, 1
      %s29 = scalar_select %p26, %s27, %s28
      %p32 = pneg %p26
      %p33 = scmp.eq.s32.totalorder %s17, 1
      %p34 = por %p32, %p33
      %p35 = scmp.ne.s32.totalorder %s27, %s30
      %p36 = scmp.eq.s32.totalorder %s17, 0
      %p37 = por %p35, %p36
      %p38 = scmp.ne.s32.totalorder %s27, %s30
      %p39 = scmp.eq.s32.totalorder %s22, 1
      %p40 = por %p38, %p39
      %p41 = scmp.ne.s32.totalorder %s30, %s31
      %p42 = scmp.eq.s32.totalorder %s22, 0
      %p43 = por %p41, %p42
      %p44 = scmp.ne.s32.totalorder %s30, %s31
      %p45 = scmp.eq.s32.totalorder %s23, 1
      %p46 = por %p44, %p45
      %p48 = scmp.ne.s32.totalorder %s31, %s47
      %p49 = scmp.eq.s32.totalorder %s23, 0
      %p50 = por %p48, %p49
      %s52 = sadd.s32 %s51, 1
      %p55 = scmp.eq.s32.totalorder %s17, 1
      %p56 = scmp.ne.s32.totalorder %s51, %s53
      %p57 = scmp.eq.s32.totalorder %s17, 0
      %p58 = por %p56, %p57
      %p59 = scmp.ne.s32.totalorder %s51, %s53
      %p60 = scmp.eq.s32.totalorder %s22, 1
      %p61 = por %p59, %p60
      %p62 = scmp.ne.s32.totalorder %s53, %s54
      %p63 = scmp.eq.s32.totalorder %s22, 0
      %p64 = por %p62, %p63
      %p65 = scmp.ne.s32.totalorder %s53, %s54
      %p66 = scmp.eq.s32.totalorder %s23, 1
      %p67 = por %p65, %p66
      %p69 = scmp.ne.s32.totalorder %s54, %s68
      %p70 = scmp.eq.s32.totalorder %s23, 0
      %p71 = por %p69, %p70
      %s73 = sadd.s32 %s72, 1
      %p76 = scmp.eq.s32.totalorder %s17, 1
      %p77 = scmp.ne.s32.totalorder %s72, %s74
      %p78 = scmp.eq.s32.totalorder %s17, 0
      %p79 = por %p77, %p78
      %p80 = scmp.ne.s32.totalorder %s72, %s74
      %p81 = scmp.eq.s32.totalorder %s22, 1
      %p82 = por %p80, %p81
      %p83 = scmp.ne.s32.totalorder %s74, %s75
      %p84 = scmp.eq.s32.totalorder %s22, 0
      %p85 = por %p83, %p84
      %p86 = scmp.ne.s32.totalorder %s74, %s75
      %p87 = scmp.eq.s32.totalorder %s23, 1
      %p88 = por %p86, %p87
      %p90 = scmp.ne.s32.totalorder %s75, %s89
      %p91 = scmp.eq.s32.totalorder %s23, 0
      %p92 = por %p90, %p91
      %s94 = sadd.s32 %s93, 1
      %p97 = scmp.eq.s32.totalorder %s17, 1
      %p98 = scmp.ne.s32.totalorder %s93, %s95
      %p99 = scmp.eq.s32.totalorder %s17, 0
      %p100 = por %p98, %p99
      %p101 = scmp.ne.s32.totalorder %s93, %s95
      %p102 = scmp.eq.s32.totalorder %s22, 1
      %p103 = por %p101, %p102
      %p104 = scmp.ne.s32.totalorder %s95, %s96
      %p105 = scmp.eq.s32.totalorder %s22, 0
      %p106 = por %p104, %p105
      %p107 = scmp.ne.s32.totalorder %s95, %s96
      %p108 = scmp.eq.s32.totalorder %s23, 1
      %p109 = por %p107, %p108
      %p111 = scmp.ne.s32.totalorder %s96, %s110
      %p112 = scmp.eq.s32.totalorder %s23, 0
      %p113 = por %p111, %p112
      %s115 = sadd.s32 %s114, 1
      %p118 = scmp.eq.s32.totalorder %s17, 1
      %p119 = scmp.ne.s32.totalorder %s114, %s116
      %p120 = scmp.eq.s32.totalorder %s17, 0
      %p121 = por %p119, %p120
      %p122 = scmp.ne.s32.totalorder %s114, %s116
      %p123 = scmp.eq.s32.totalorder %s22, 1
      %p124 = por %p122, %p123
      %p125 = scmp.ne.s32.totalorder %s116, %s117
      %p126 = scmp.eq.s32.totalorder %s22, 0
      %p127 = por %p125, %p126
      %p128 = scmp.ne.s32.totalorder %s116, %s117
      %p129 = scmp.eq.s32.totalorder %s23, 1
      %p130 = por %p128, %p129
      %p132 = scmp.ne.s32.totalorder %s117, %s131
      %p133 = scmp.eq.s32.totalorder %s23, 0
      %p134 = por %p132, %p133
      %s136 = sadd.s32 %s135, 1
      %p139 = scmp.eq.s32.totalorder %s17, 1
      %p140 = scmp.ne.s32.totalorder %s135, %s137
      %p141 = scmp.eq.s32.totalorder %s17, 0
      %p142 = por %p140, %p141
      %p143 = scmp.ne.s32.totalorder %s135, %s137
      %p144 = scmp.eq.s32.totalorder %s22, 1
      %p145 = por %p143, %p144
      %p146 = scmp.ne.s32.totalorder %s137, %s138
      %p147 = scmp.eq.s32.totalorder %s22, 0
      %p148 = por %p146, %p147
      %p149 = scmp.ne.s32.totalorder %s137, %s138
      %p150 = scmp.eq.s32.totalorder %s23, 1
      %p151 = por %p149, %p150
      %p153 = scmp.ne.s32.totalorder %s138, %s152
      %p154 = scmp.eq.s32.totalorder %s23, 0
      %p155 = por %p153, %p154
      %s157 = sadd.s32 %s156, 1
      %p160 = scmp.eq.s32.totalorder %s17, 1
      %p161 = scmp.ne.s32.totalorder %s156, %s158
      %p162 = scmp.eq.s32.totalorder %s17, 0
      %p163 = por %p161, %p162
      %p164 = scmp.ne.s32.totalorder %s156, %s158
      %p165 = scmp.eq.s32.totalorder %s22, 1
      %p166 = por %p164, %p165
      %p167 = scmp.ne.s32.totalorder %s158, %s159
      %p168 = scmp.eq.s32.totalorder %s22, 0
      %p169 = por %p167, %p168
      %p170 = scmp.ne.s32.totalorder %s158, %s159
      %p171 = scmp.eq.s32.totalorder %s23, 1
      %p172 = por %p170, %p171
      %p174 = scmp.ne.s32.totalorder %s159, %s173
      %p175 = scmp.eq.s32.totalorder %s23, 0
      %p176 = por %p174, %p175
      %s178 = sadd.s32 %s177, 1
      %p181 = scmp.eq.s32.totalorder %s17, 1
      %p182 = scmp.ne.s32.totalorder %s177, %s179
      %p183 = scmp.eq.s32.totalorder %s17, 0
      %p184 = por %p182, %p183
      %p185 = scmp.ne.s32.totalorder %s177, %s179
      %p186 = scmp.eq.s32.totalorder %s22, 1
      %p187 = por %p185, %p186
      %p188 = scmp.ne.s32.totalorder %s179, %s180
      %p189 = scmp.eq.s32.totalorder %s22, 0
      %p190 = por %p188, %p189
      %p191 = scmp.ne.s32.totalorder %s179, %s180
      %p192 = scmp.eq.s32.totalorder %s23, 1
      %p193 = por %p191, %p192
      %p195 = scmp.ne.s32.totalorder %s180, %s194
      %p196 = scmp.eq.s32.totalorder %s23, 0
      %p197 = por %p195, %p196
      %s198 = ssub.s32 %s17, %s24
      %p199 = scmp.eq.s32.totalorder %s198, 0
      %s201 = sadd.s32 %s200, 1
      %s202 = scalar_select %p199, %s200, %s201
      %p205 = pneg %p199
      %p206 = scmp.eq.s32.totalorder %s17, 1
      %p207 = por %p205, %p206
      %p208 = scmp.ne.s32.totalorder %s200, %s203
      %p209 = scmp.eq.s32.totalorder %s17, 0
      %p210 = por %p208, %p209
      %p211 = scmp.ne.s32.totalorder %s200, %s203
      %p212 = scmp.eq.s32.totalorder %s22, 1
      %p213 = por %p211, %p212
      %p214 = scmp.ne.s32.totalorder %s203, %s204
      %p215 = scmp.eq.s32.totalorder %s22, 0
      %p216 = por %p214, %p215
      %p217 = scmp.ne.s32.totalorder %s203, %s204
      %p218 = scmp.eq.s32.totalorder %s23, 1
      %p219 = por %p217, %p218
      %p221 = scmp.ne.s32.totalorder %s204, %s220
      %p222 = scmp.eq.s32.totalorder %s23, 0
      %p223 = por %p221, %p222
      %p224 = scmp.le.s32.totalorder 1, %s17
      %p225 = scmp.lt.s32.totalorder %s17, 3
      %p226 = pnand %p224, %p225
      %p227 = pneg %p226
      // Predicated region
      $region9: #{tpu_custom_call.1} parent=5 // pred_check
        _
      $region10: #{tpu_custom_call.1} parent=5 // pred_check_branch
        %229 = sbr.rel (%p226) target = $region12
      $region11: #{tpu_custom_call.1} parent=5 // pred_region
        %s230 = ssub.s32 %s17, 1
        // Predicated region
        $region13: #{tpu_custom_call.1} parent=11 // pred_check
          %p231 = pneg %p64
        $region14: #{tpu_custom_call.1} parent=11 // pred_check_branch
          %233 = sbr.rel (%p231) target = $region16
        $region15: #{tpu_custom_call.1} parent=11 // pred_region
          _
        $region16: #{tpu_custom_call.1} parent=11 // pred_fallthru
          _
        // Predicated region
        $region17: #{tpu_custom_call.1} parent=11 // pred_check
          %p234 = pneg %p85
        $region18: #{tpu_custom_call.1} parent=11 // pred_check_branch
          %236 = sbr.rel (%p234) target = $region20
        $region19: #{tpu_custom_call.1} parent=11 // pred_region
          _
        $region20: #{tpu_custom_call.1} parent=11 // pred_fallthru
          _
        // Predicated region
        $region21: #{tpu_custom_call.1} parent=11 // pred_check
          %p237 = pneg %p106
        $region22: #{tpu_custom_call.1} parent=11 // pred_check_branch
          %239 = sbr.rel (%p237) target = $region24
        $region23: #{tpu_custom_call.1} parent=11 // pred_region
          _
        $region24: #{tpu_custom_call.1} parent=11 // pred_fallthru
          _
        // Predicated region
        $region25: #{tpu_custom_call.1} parent=11 // pred_check
          %p240 = pneg %p127
        $region26: #{tpu_custom_call.1} parent=11 // pred_check_branch
          %242 = sbr.rel (%p240) target = $region28
        $region27: #{tpu_custom_call.1} parent=11 // pred_region
          _
        $region28: #{tpu_custom_call.1} parent=11 // pred_fallthru
          _
        // Predicated region
        $region29: #{tpu_custom_call.1} parent=11 // pred_check
          %p243 = pneg %p148
        $region30: #{tpu_custom_call.1} parent=11 // pred_check_branch
          %245 = sbr.rel (%p243) target = $region32
        $region31: #{tpu_custom_call.1} parent=11 // pred_region
          _
        $region32: #{tpu_custom_call.1} parent=11 // pred_fallthru
          _
        // Predicated region
        $region33: #{tpu_custom_call.1} parent=11 // pred_check
          %p246 = pneg %p169
        $region34: #{tpu_custom_call.1} parent=11 // pred_check_branch
          %248 = sbr.rel (%p246) target = $region36
        $region35: #{tpu_custom_call.1} parent=11 // pred_region
          _
        $region36: #{tpu_custom_call.1} parent=11 // pred_fallthru
          _
        // Predicated region
        $region37: #{tpu_custom_call.1} parent=11 // pred_check
          %p249 = pneg %p190
        $region38: #{tpu_custom_call.1} parent=11 // pred_check_branch
          %251 = sbr.rel (%p249) target = $region40
        $region39: #{tpu_custom_call.1} parent=11 // pred_region
          _
        $region40: #{tpu_custom_call.1} parent=11 // pred_fallthru
          _
      $region12: #{tpu_custom_call.1} parent=5 // pred_fallthru
        _
      %p252 = scmp.lt.s32.totalorder %s17, 2
      // Predicated region
      $region41: #{tpu_custom_call.1} parent=5 // pred_check
        %p253 = pneg %p252
      $region42: #{tpu_custom_call.1} parent=5 // pred_check_branch
        %255 = sbr.rel (%p253) target = $region44
      $region43: #{tpu_custom_call.1} parent=5 // pred_region
        // Predicated region
        $region45: #{tpu_custom_call.1} parent=43 // pred_check
          %p256 = pneg %p37
        $region46: #{tpu_custom_call.1} parent=43 // pred_check_branch
          %258 = sbr.rel (%p256) target = $region48
        $region47: #{tpu_custom_call.1} parent=43 // pred_region
          %p259 = scmp.lt.s32.totalorder %s17, 1
          %s260 = scalar_select %p259, %s17, 1
          %s261 = smul.addr %s260, 8
          %s262 = scalar_lea.vmem %s0, %s261
        $region48: #{tpu_custom_call.1} parent=43 // pred_fallthru
          _
      $region44: #{tpu_custom_call.1} parent=5 // pred_fallthru
        _
      %p263 = scmp.le.s32.totalorder 1, %s17
      %p264 = scmp.lt.s32.totalorder %s17, 3
      %p265 = pnand %p263, %p264
      %p266 = pneg %p265
      // Predicated region
      $region49: #{tpu_custom_call.1} parent=5 // pred_check
        _
      $region50: #{tpu_custom_call.1} parent=5 // pred_check_branch
        %268 = sbr.rel (%p265) target = $region52
      $region51: #{tpu_custom_call.1} parent=5 // pred_region
        %s269 = ssub.s32 %s17, 1
        %p270 = scmp.lt.s32.totalorder %s22, 1
        %s271 = scalar_select %p270, %s22, 1
        %s272 = smul.addr %s271, 8
        %s273 = scalar_lea.vmem %s0, %s272
        %p274 = pneg %p43
        %p275 = pneg %p40
        %p276 = pneg %p64
        %p277 = pneg %p61
        %p278 = pneg %p85
        %p279 = pneg %p82
        %p280 = pneg %p106
        %p281 = pneg %p103
        %p282 = pneg %p127
        %p283 = pneg %p124
        %p284 = pneg %p148
        %p285 = pneg %p145
        %p286 = pneg %p169
        %p287 = pneg %p166
        %p288 = pneg %p190
        %p289 = pneg %p187
        %p290 = pneg %p216
        %p291 = pneg %p213
        %s292 = sand.u32 %s203, 1
        %s293 = scalar_lea.sflag [#allocation3], %s292
        %s294 = sand.u32 %s203, 1
        %s295 = smul.addr %s294, 8
        %s296 = scalar_lea.vmem [#allocation2], %s295
        %p297 = scmp.lt.s32.totalorder %s22, 1
        %s298 = scalar_select %p297, %s22, 1
        %s299 = smul.addr %s298, 8
        %s300 = scalar_lea.vmem %s0, %s299
        %v301 = vld [vmem:[%s300] sm:$0xff]
        %v302 = vld [vmem:[%s7] sm:$0xf]
        %v303 = vld [vmem:[%s5] sm:$0x1]
        %v304 = vlaneseq
        %v305 = vand.u32 %v304, 127
        %vm306 = vcmp.lt.s32.totalorder %v305, 32
        %v307 = vsel %vm306, 1, 0
        %v308 = vcvt.s32.f32 %v307
        %v309 = vld [vmem:[%s1] sm:$0xff]
        %v310 = vld [vmem:[%s1 + $0x8] sm:$0xff]
        %v311 = vld [vmem:[%s1 + $0x10] sm:$0xff]
        %v312 = vld [vmem:[%s1 + $0x18] sm:$0xff]
        %v313 = vld [vmem:[%s1 + $0x20] sm:$0xff]
        %v314 = vld [vmem:[%s1 + $0x28] sm:$0xff]
        %v315 = vld [vmem:[%s1 + $0x30] sm:$0xff]
        %v316 = vld [vmem:[%s1 + $0x38] sm:$0xff]
        %v317 = vld [vmem:[%s1 + $0x40] sm:$0xff]
        %v318 = vld [vmem:[%s1 + $0x48] sm:$0xff]
        %v319 = vld [vmem:[%s1 + $0x50] sm:$0xff]
        %v320 = vld [vmem:[%s1 + $0x58] sm:$0xff]
        %v321 = vld [vmem:[%s1 + $0x60] sm:$0xff]
        %v322 = vld [vmem:[%s1 + $0x68] sm:$0xff]
        %v323 = vld [vmem:[%s1 + $0x70] sm:$0xff]
        %v324 = vld [vmem:[%s1 + $0x78] sm:$0xff]
        %v325 = vld [vmem:[%s1 + $0x80] sm:$0xff]
        %v326 = vld [vmem:[%s1 + $0x88] sm:$0xff]
        %v327 = vld [vmem:[%s1 + $0x90] sm:$0xff]
        %v328 = vld [vmem:[%s1 + $0x98] sm:$0xff]
        %v329 = vld [vmem:[%s1 + $0xa0] sm:$0xff]
        %v330 = vld [vmem:[%s1 + $0xa8] sm:$0xff]
        %v331 = vld [vmem:[%s1 + $0xb0] sm:$0xff]
        %v332 = vld [vmem:[%s1 + $0xb8] sm:$0xff]
        %v333 = vld [vmem:[%s1 + $0xc0] sm:$0xff]
        %v334 = vld [vmem:[%s1 + $0xc8] sm:$0xff]
        %v335 = vld [vmem:[%s1 + $0xd0] sm:$0xff]
        %v336 = vld [vmem:[%s1 + $0xd8] sm:$0xff]
        %v337 = vld [vmem:[%s1 + $0xe0] sm:$0xff]
        %v338 = vld [vmem:[%s1 + $0xe8] sm:$0xff]
        %v339 = vld [vmem:[%s1 + $0xf0] sm:$0xff]
        %v340 = vld [vmem:[%s1 + $0xf8] sm:$0xff]
        %v341 = vld [vmem:[%s1 + $0x100] sm:$0xff]
        %v342 = vld [vmem:[%s1 + $0x108] sm:$0xff]
        %v343 = vld [vmem:[%s1 + $0x110] sm:$0xff]
        %v344 = vld [vmem:[%s1 + $0x118] sm:$0xff]
        %v345 = vld [vmem:[%s1 + $0x120] sm:$0xff]
        %v346 = vld [vmem:[%s1 + $0x128] sm:$0xff]
        %v347 = vld [vmem:[%s1 + $0x130] sm:$0xff]
        %v348 = vld [vmem:[%s1 + $0x138] sm:$0xff]
        %v349 = vld [vmem:[%s1 + $0x140] sm:$0xff]
        %v350 = vld [vmem:[%s1 + $0x148] sm:$0xff]
        %v351 = vld [vmem:[%s1 + $0x150] sm:$0xff]
        %v352 = vld [vmem:[%s1 + $0x158] sm:$0xff]
        %v353 = vld [vmem:[%s1 + $0x160] sm:$0xff]
        %v354 = vld [vmem:[%s1 + $0x168] sm:$0xff]
        %v355 = vld [vmem:[%s1 + $0x170] sm:$0xff]
        %v356 = vld [vmem:[%s1 + $0x178] sm:$0xff]
        %v357 = vld [vmem:[%s1 + $0x180] sm:$0xff]
        %v358 = vld [vmem:[%s1 + $0x188] sm:$0xff]
        %v359 = vld [vmem:[%s1 + $0x190] sm:$0xff]
        %v360 = vld [vmem:[%s1 + $0x198] sm:$0xff]
        %v361 = vld [vmem:[%s1 + $0x1a0] sm:$0xff]
        %v362 = vld [vmem:[%s1 + $0x1a8] sm:$0xff]
        %v363 = vld [vmem:[%s1 + $0x1b0] sm:$0xff]
        %v364 = vld [vmem:[%s1 + $0x1b8] sm:$0xff]
        %v365 = vld [vmem:[%s1 + $0x1c0] sm:$0xff]
        %v366 = vld [vmem:[%s1 + $0x1c8] sm:$0xff]
        %v367 = vld [vmem:[%s1 + $0x1d0] sm:$0xff]
        %v368 = vld [vmem:[%s1 + $0x1d8] sm:$0xff]
        %v369 = vld [vmem:[%s1 + $0x1e0] sm:$0xff]
        %v370 = vld [vmem:[%s1 + $0x1e8] sm:$0xff]
        %v371 = vld [vmem:[%s1 + $0x1f0] sm:$0xff]
        %v372 = vld [vmem:[%s1 + $0x1f8] sm:$0xff]
        %v373 = vld [vmem:[%s2] sm:$0x1]
        %v374 = vld [vmem:[%s2 + $0x1] sm:$0x1]
        %v375 = vld [vmem:[%s2 + $0x2] sm:$0x1]
        %v376 = vld [vmem:[%s2 + $0x3] sm:$0x1]
        %v381 = vlaneseq
        %v382 = vshrl.u32 %v381, 7
        %v383 = vsub.s32 0, %v382
        %v384 = vrot.slane %v373, %v383
        %v385 = vlaneseq
        %v386 = vshrl.u32 %v385, 7
        %v387 = vsub.s32 0, %v386
        %v388 = vrot.slane %v374, %v387
        %v389 = vlaneseq
        %v390 = vshrl.u32 %v389, 7
        %v391 = vsub.s32 0, %v390
        %v392 = vrot.slane %v375, %v391
        %v393 = vlaneseq
        %v394 = vshrl.u32 %v393, 7
        %v395 = vsub.s32 0, %v394
        %v396 = vrot.slane %v376, %v395
        %401 = vmatprep.subr.mxu0 0.0
        %402 = vmatpush1.msra.mxu0 %v324
        %403 = vmatprep.subr.mxu0 0.0
        %404 = vmatpush1.msra.mxu0 %v323
        %405 = vmatprep.subr.mxu0 0.0
        %406 = vmatpush1.msra.mxu0 %v322
        %407 = vmatprep.subr.mxu0 0.0
        %408 = vmatpush1.msra.mxu0 %v321
        %409 = vmatprep.subr.mxu0 0.0
        %410 = vmatpush1.msra.mxu0 %v320
        %411 = vmatprep.subr.mxu0 0.0
        %412 = vmatpush1.msra.mxu0 %v319
        %413 = vmatprep.subr.mxu0 0.0
        %414 = vmatpush1.msra.mxu0 %v318
        %415 = vmatprep.subr.mxu0 0.0
        %416 = vmatpush1.msra.mxu0 %v317
        %417 = vmatprep.subr.mxu0 0.0
        %418 = vmatpush1.msra.mxu0 %v316
        %419 = vmatprep.subr.mxu0 0.0
        %420 = vmatpush1.msra.mxu0 %v315
        %421 = vmatprep.subr.mxu0 0.0
        %422 = vmatpush1.msra.mxu0 %v314
        %423 = vmatprep.subr.mxu0 0.0
        %424 = vmatpush1.msra.mxu0 %v313
        %425 = vmatprep.subr.mxu0 0.0
        %426 = vmatpush1.msra.mxu0 %v312
        %427 = vmatprep.subr.mxu0 0.0
        %428 = vmatpush1.msra.mxu0 %v311
        %429 = vmatprep.subr.mxu0 0.0
        %430 = vmatpush1.msra.mxu0 %v310
        %431 = vmatprep.subr.mxu0 0.0
        %432 = vmatpush1.msra.mxu0 %v309
        %433 = vmatprep.subr.mxu0 0.0
        %434 = vmatpush2.msra.mxu0 0.0
        %435 = vmatprep.subr.mxu0 0.0
        %436 = vmatpush2.msra.mxu0 0.0
        %437 = vmatprep.subr.mxu0 0.0
        %438 = vmatpush2.msra.mxu0 0.0
        %439 = vmatprep.subr.mxu0 0.0
        %440 = vmatpush2.msra.mxu0 0.0
        %441 = vmatprep.subr.mxu0 0.0
        %442 = vmatpush2.msra.mxu0 0.0
        %443 = vmatprep.subr.mxu0 0.0
        %444 = vmatpush2.msra.mxu0 0.0
        %445 = vmatprep.subr.mxu0 0.0
        %446 = vmatpush2.msra.mxu0 0.0
        %447 = vmatprep.subr.mxu0 0.0
        %448 = vmatpush2.msra.mxu0 0.0
        %449 = vmatprep.subr.mxu0 0.0
        %450 = vmatpush2.msra.mxu0 0.0
        %451 = vmatprep.subr.mxu0 0.0
        %452 = vmatpush2.msra.mxu0 0.0
        %453 = vmatprep.subr.mxu0 0.0
        %454 = vmatpush2.msra.mxu0 0.0
        %455 = vmatprep.subr.mxu0 0.0
        %456 = vmatpush2.msra.mxu0 0.0
        %457 = vmatprep.subr.mxu0 0.0
        %458 = vmatpush2.msra.mxu0 0.0
        %459 = vmatprep.subr.mxu0 0.0
        %460 = vmatpush2.msra.mxu0 0.0
        %461 = vmatprep.subr.mxu0 0.0
        %462 = vmatpush2.msra.mxu0 0.0
        %463 = vmatprep.subr.mxu0 0.0
        %464 = vmatpush2.msra.mxu0 0.0
        %465 = vmatprep.mubr.f32.mxu0 0.0
        %466 = vmatmul.mubr.f32.gmra.mxu0 %v301
        %v467 = vpop.f32.mrf.mxu0
        %v468 = vadd.f32 %v384, %v467
        %v469 = vpop.f32.mrf.mxu0
        %470 = vdwg.mxu0
        %471 = vmatprep.subr.mxu0 0.0
        %472 = vmatpush1.msra.mxu0 %v340
        %473 = vmatprep.subr.mxu0 0.0
        %474 = vmatpush1.msra.mxu0 %v339
        %475 = vmatprep.subr.mxu0 0.0
        %476 = vmatpush1.msra.mxu0 %v338
        %477 = vmatprep.subr.mxu0 0.0
        %478 = vmatpush1.msra.mxu0 %v337
        %479 = vmatprep.subr.mxu0 0.0
        %480 = vmatpush1.msra.mxu0 %v336
        %481 = vmatprep.subr.mxu0 0.0
        %482 = vmatpush1.msra.mxu0 %v335
        %483 = vmatprep.subr.mxu0 0.0
        %484 = vmatpush1.msra.mxu0 %v334
        %485 = vmatprep.subr.mxu0 0.0
        %486 = vmatpush1.msra.mxu0 %v333
        %487 = vmatprep.subr.mxu0 0.0
        %488 = vmatpush1.msra.mxu0 %v332
        %489 = vmatprep.subr.mxu0 0.0
        %490 = vmatpush1.msra.mxu0 %v331
        %491 = vmatprep.subr.mxu0 0.0
        %492 = vmatpush1.msra.mxu0 %v330
        %493 = vmatprep.subr.mxu0 0.0
        %494 = vmatpush1.msra.mxu0 %v329
        %495 = vmatprep.subr.mxu0 0.0
        %496 = vmatpush1.msra.mxu0 %v328
        %497 = vmatprep.subr.mxu0 0.0
        %498 = vmatpush1.msra.mxu0 %v327
        %499 = vmatprep.subr.mxu0 0.0
        %500 = vmatpush1.msra.mxu0 %v326
        %501 = vmatprep.subr.mxu0 0.0
        %502 = vmatpush1.msra.mxu0 %v325
        %503 = vmatprep.subr.mxu0 0.0
        %504 = vmatpush2.msra.mxu0 0.0
        %505 = vmatprep.subr.mxu0 0.0
        %506 = vmatpush2.msra.mxu0 0.0
        %507 = vmatprep.subr.mxu0 0.0
        %508 = vmatpush2.msra.mxu0 0.0
        %509 = vmatprep.subr.mxu0 0.0
        %510 = vmatpush2.msra.mxu0 0.0
        %511 = vmatprep.subr.mxu0 0.0
        %512 = vmatpush2.msra.mxu0 0.0
        %513 = vmatprep.subr.mxu0 0.0
        %514 = vmatpush2.msra.mxu0 0.0
        %515 = vmatprep.subr.mxu0 0.0
        %516 = vmatpush2.msra.mxu0 0.0
        %517 = vmatprep.subr.mxu0 0.0
        %518 = vmatpush2.msra.mxu0 0.0
        %519 = vmatprep.subr.mxu0 0.0
        %520 = vmatpush2.msra.mxu0 0.0
        %521 = vmatprep.subr.mxu0 0.0
        %522 = vmatpush2.msra.mxu0 0.0
        %523 = vmatprep.subr.mxu0 0.0
        %524 = vmatpush2.msra.mxu0 0.0
        %525 = vmatprep.subr.mxu0 0.0
        %526 = vmatpush2.msra.mxu0 0.0
        %527 = vmatprep.subr.mxu0 0.0
        %528 = vmatpush2.msra.mxu0 0.0
        %529 = vmatprep.subr.mxu0 0.0
        %530 = vmatpush2.msra.mxu0 0.0
        %531 = vmatprep.subr.mxu0 0.0
        %532 = vmatpush2.msra.mxu0 0.0
        %533 = vmatprep.subr.mxu0 0.0
        %534 = vmatpush2.msra.mxu0 0.0
        %535 = vmatprep.mubr.f32.mxu0 0.0
        %536 = vmatmul.mubr.f32.gmra.mxu0 %v301
        %v537 = vpop.f32.mrf.mxu0
        %v538 = vadd.f32 %v388, %v537
        %v539 = vpop.f32.mrf.mxu0
        %540 = vdwg.mxu0
        %541 = vmatprep.subr.mxu0 0.0
        %542 = vmatpush1.msra.mxu0 %v356
        %543 = vmatprep.subr.mxu0 0.0
        %544 = vmatpush1.msra.mxu0 %v355
        %545 = vmatprep.subr.mxu0 0.0
        %546 = vmatpush1.msra.mxu0 %v354
        %547 = vmatprep.subr.mxu0 0.0
        %548 = vmatpush1.msra.mxu0 %v353
        %549 = vmatprep.subr.mxu0 0.0
        %550 = vmatpush1.msra.mxu0 %v352
        %551 = vmatprep.subr.mxu0 0.0
        %552 = vmatpush1.msra.mxu0 %v351
        %553 = vmatprep.subr.mxu0 0.0
        %554 = vmatpush1.msra.mxu0 %v350
        %555 = vmatprep.subr.mxu0 0.0
        %556 = vmatpush1.msra.mxu0 %v349
        %557 = vmatprep.subr.mxu0 0.0
        %558 = vmatpush1.msra.mxu0 %v348
        %559 = vmatprep.subr.mxu0 0.0
        %560 = vmatpush1.msra.mxu0 %v347
        %561 = vmatprep.subr.mxu0 0.0
        %562 = vmatpush1.msra.mxu0 %v346
        %563 = vmatprep.subr.mxu0 0.0
        %564 = vmatpush1.msra.mxu0 %v345
        %565 = vmatprep.subr.mxu0 0.0
        %566 = vmatpush1.msra.mxu0 %v344
        %567 = vmatprep.subr.mxu0 0.0
        %568 = vmatpush1.msra.mxu0 %v343
        %569 = vmatprep.subr.mxu0 0.0
        %570 = vmatpush1.msra.mxu0 %v342
        %571 = vmatprep.subr.mxu0 0.0
        %572 = vmatpush1.msra.mxu0 %v341
        %573 = vmatprep.subr.mxu0 0.0
        %574 = vmatpush2.msra.mxu0 0.0
        %575 = vmatprep.subr.mxu0 0.0
        %576 = vmatpush2.msra.mxu0 0.0
        %577 = vmatprep.subr.mxu0 0.0
        %578 = vmatpush2.msra.mxu0 0.0
        %579 = vmatprep.subr.mxu0 0.0
        %580 = vmatpush2.msra.mxu0 0.0
        %581 = vmatprep.subr.mxu0 0.0
        %582 = vmatpush2.msra.mxu0 0.0
        %583 = vmatprep.subr.mxu0 0.0
        %584 = vmatpush2.msra.mxu0 0.0
        %585 = vmatprep.subr.mxu0 0.0
        %586 = vmatpush2.msra.mxu0 0.0
        %587 = vmatprep.subr.mxu0 0.0
        %588 = vmatpush2.msra.mxu0 0.0
        %589 = vmatprep.subr.mxu0 0.0
        %590 = vmatpush2.msra.mxu0 0.0
        %591 = vmatprep.subr.mxu0 0.0
        %592 = vmatpush2.msra.mxu0 0.0
        %593 = vmatprep.subr.mxu0 0.0
        %594 = vmatpush2.msra.mxu0 0.0
        %595 = vmatprep.subr.mxu0 0.0
        %596 = vmatpush2.msra.mxu0 0.0
        %597 = vmatprep.subr.mxu0 0.0
        %598 = vmatpush2.msra.mxu0 0.0
        %599 = vmatprep.subr.mxu0 0.0
        %600 = vmatpush2.msra.mxu0 0.0
        %601 = vmatprep.subr.mxu0 0.0
        %602 = vmatpush2.msra.mxu0 0.0
        %603 = vmatprep.subr.mxu0 0.0
        %604 = vmatpush2.msra.mxu0 0.0
        %605 = vmatprep.mubr.f32.mxu0 0.0
        %606 = vmatmul.mubr.f32.gmra.mxu0 %v301
        %v607 = vpop.f32.mrf.mxu0
        %v608 = vadd.f32 %v392, %v607
        %v609 = vpop.f32.mrf.mxu0
        %610 = vdwg.mxu0
        %611 = vmatprep.subr.mxu0 0.0
        %612 = vmatpush1.msra.mxu0 %v372
        %613 = vmatprep.subr.mxu0 0.0
        %614 = vmatpush1.msra.mxu0 %v371
        %615 = vmatprep.subr.mxu0 0.0
        %616 = vmatpush1.msra.mxu0 %v370
        %617 = vmatprep.subr.mxu0 0.0
        %618 = vmatpush1.msra.mxu0 %v369
        %619 = vmatprep.subr.mxu0 0.0
        %620 = vmatpush1.msra.mxu0 %v368
        %621 = vmatprep.subr.mxu0 0.0
        %622 = vmatpush1.msra.mxu0 %v367
        %623 = vmatprep.subr.mxu0 0.0
        %624 = vmatpush1.msra.mxu0 %v366
        %625 = vmatprep.subr.mxu0 0.0
        %626 = vmatpush1.msra.mxu0 %v365
        %627 = vmatprep.subr.mxu0 0.0
        %628 = vmatpush1.msra.mxu0 %v364
        %629 = vmatprep.subr.mxu0 0.0
        %630 = vmatpush1.msra.mxu0 %v363
        %631 = vmatprep.subr.mxu0 0.0
        %632 = vmatpush1.msra.mxu0 %v362
        %633 = vmatprep.subr.mxu0 0.0
        %634 = vmatpush1.msra.mxu0 %v361
        %635 = vmatprep.subr.mxu0 0.0
        %636 = vmatpush1.msra.mxu0 %v360
        %637 = vmatprep.subr.mxu0 0.0
        %638 = vmatpush1.msra.mxu0 %v359
        %639 = vmatprep.subr.mxu0 0.0
        %640 = vmatpush1.msra.mxu0 %v358
        %641 = vmatprep.subr.mxu0 0.0
        %642 = vmatpush1.msra.mxu0 %v357
        %643 = vmatprep.subr.mxu0 0.0
        %644 = vmatpush2.msra.mxu0 0.0
        %645 = vmatprep.subr.mxu0 0.0
        %646 = vmatpush2.msra.mxu0 0.0
        %647 = vmatprep.subr.mxu0 0.0
        %648 = vmatpush2.msra.mxu0 0.0
        %649 = vmatprep.subr.mxu0 0.0
        %650 = vmatpush2.msra.mxu0 0.0
        %651 = vmatprep.subr.mxu0 0.0
        %652 = vmatpush2.msra.mxu0 0.0
        %653 = vmatprep.subr.mxu0 0.0
        %654 = vmatpush2.msra.mxu0 0.0
        %655 = vmatprep.subr.mxu0 0.0
        %656 = vmatpush2.msra.mxu0 0.0
        %657 = vmatprep.subr.mxu0 0.0
        %658 = vmatpush2.msra.mxu0 0.0
        %659 = vmatprep.subr.mxu0 0.0
        %660 = vmatpush2.msra.mxu0 0.0
        %661 = vmatprep.subr.mxu0 0.0
        %662 = vmatpush2.msra.mxu0 0.0
        %663 = vmatprep.subr.mxu0 0.0
        %664 = vmatpush2.msra.mxu0 0.0
        %665 = vmatprep.subr.mxu0 0.0
        %666 = vmatpush2.msra.mxu0 0.0
        %667 = vmatprep.subr.mxu0 0.0
        %668 = vmatpush2.msra.mxu0 0.0
        %669 = vmatprep.subr.mxu0 0.0
        %670 = vmatpush2.msra.mxu0 0.0
        %671 = vmatprep.subr.mxu0 0.0
        %672 = vmatpush2.msra.mxu0 0.0
        %673 = vmatprep.subr.mxu0 0.0
        %674 = vmatpush2.msra.mxu0 0.0
        %675 = vmatprep.mubr.f32.mxu0 0.0
        %676 = vmatmul.mubr.f32.gmra.mxu0 %v301
        %v677 = vpop.f32.mrf.mxu0
        %v678 = vadd.f32 %v396, %v677
        %v679 = vpop.f32.mrf.mxu0
        %680 = vdwg.mxu0
        %s681 = scalar_lea.vmem %s1, 512
        %v682 = vld [vmem:[%s681] sm:$0xff]
        %v683 = vld [vmem:[%s681 + $0x8] sm:$0xff]
        %v684 = vld [vmem:[%s681 + $0x10] sm:$0xff]
        %v685 = vld [vmem:[%s681 + $0x18] sm:$0xff]
        %v686 = vld [vmem:[%s681 + $0x20] sm:$0xff]
        %v687 = vld [vmem:[%s681 + $0x28] sm:$0xff]
        %v688 = vld [vmem:[%s681 + $0x30] sm:$0xff]
        %v689 = vld [vmem:[%s681 + $0x38] sm:$0xff]
        %v690 = vld [vmem:[%s681 + $0x40] sm:$0xff]
        %v691 = vld [vmem:[%s681 + $0x48] sm:$0xff]
        %v692 = vld [vmem:[%s681 + $0x50] sm:$0xff]
        %v693 = vld [vmem:[%s681 + $0x58] sm:$0xff]
        %v694 = vld [vmem:[%s681 + $0x60] sm:$0xff]
        %v695 = vld [vmem:[%s681 + $0x68] sm:$0xff]
        %v696 = vld [vmem:[%s681 + $0x70] sm:$0xff]
        %v697 = vld [vmem:[%s681 + $0x78] sm:$0xff]
        %v698 = vld [vmem:[%s681 + $0x80] sm:$0xff]
        %v699 = vld [vmem:[%s681 + $0x88] sm:$0xff]
        %v700 = vld [vmem:[%s681 + $0x90] sm:$0xff]
        %v701 = vld [vmem:[%s681 + $0x98] sm:$0xff]
        %v702 = vld [vmem:[%s681 + $0xa0] sm:$0xff]
        %v703 = vld [vmem:[%s681 + $0xa8] sm:$0xff]
        %v704 = vld [vmem:[%s681 + $0xb0] sm:$0xff]
        %v705 = vld [vmem:[%s681 + $0xb8] sm:$0xff]
        %v706 = vld [vmem:[%s681 + $0xc0] sm:$0xff]
        %v707 = vld [vmem:[%s681 + $0xc8] sm:$0xff]
        %v708 = vld [vmem:[%s681 + $0xd0] sm:$0xff]
        %v709 = vld [vmem:[%s681 + $0xd8] sm:$0xff]
        %v710 = vld [vmem:[%s681 + $0xe0] sm:$0xff]
        %v711 = vld [vmem:[%s681 + $0xe8] sm:$0xff]
        %v712 = vld [vmem:[%s681 + $0xf0] sm:$0xff]
        %v713 = vld [vmem:[%s681 + $0xf8] sm:$0xff]
        %v714 = vld [vmem:[%s681 + $0x100] sm:$0xff]
        %v715 = vld [vmem:[%s681 + $0x108] sm:$0xff]
        %v716 = vld [vmem:[%s681 + $0x110] sm:$0xff]
        %v717 = vld [vmem:[%s681 + $0x118] sm:$0xff]
        %v718 = vld [vmem:[%s681 + $0x120] sm:$0xff]
        %v719 = vld [vmem:[%s681 + $0x128] sm:$0xff]
        %v720 = vld [vmem:[%s681 + $0x130] sm:$0xff]
        %v721 = vld [vmem:[%s681 + $0x138] sm:$0xff]
        %v722 = vld [vmem:[%s681 + $0x140] sm:$0xff]
        %v723 = vld [vmem:[%s681 + $0x148] sm:$0xff]
        %v724 = vld [vmem:[%s681 + $0x150] sm:$0xff]
        %v725 = vld [vmem:[%s681 + $0x158] sm:$0xff]
        %v726 = vld [vmem:[%s681 + $0x160] sm:$0xff]
        %v727 = vld [vmem:[%s681 + $0x168] sm:$0xff]
        %v728 = vld [vmem:[%s681 + $0x170] sm:$0xff]
        %v729 = vld [vmem:[%s681 + $0x178] sm:$0xff]
        %v730 = vld [vmem:[%s681 + $0x180] sm:$0xff]
        %v731 = vld [vmem:[%s681 + $0x188] sm:$0xff]
        %v732 = vld [vmem:[%s681 + $0x190] sm:$0xff]
        %v733 = vld [vmem:[%s681 + $0x198] sm:$0xff]
        %v734 = vld [vmem:[%s681 + $0x1a0] sm:$0xff]
        %v735 = vld [vmem:[%s681 + $0x1a8] sm:$0xff]
        %v736 = vld [vmem:[%s681 + $0x1b0] sm:$0xff]
        %v737 = vld [vmem:[%s681 + $0x1b8] sm:$0xff]
        %v738 = vld [vmem:[%s681 + $0x1c0] sm:$0xff]
        %v739 = vld [vmem:[%s681 + $0x1c8] sm:$0xff]
        %v740 = vld [vmem:[%s681 + $0x1d0] sm:$0xff]
        %v741 = vld [vmem:[%s681 + $0x1d8] sm:$0xff]
        %v742 = vld [vmem:[%s681 + $0x1e0] sm:$0xff]
        %v743 = vld [vmem:[%s681 + $0x1e8] sm:$0xff]
        %v744 = vld [vmem:[%s681 + $0x1f0] sm:$0xff]
        %v745 = vld [vmem:[%s681 + $0x1f8] sm:$0xff]
        %s746 = scalar_lea.vmem %s2, 4
        %v747 = vld [vmem:[%s746] sm:$0x1]
        %v748 = vld [vmem:[%s746 + $0x1] sm:$0x1]
        %v749 = vld [vmem:[%s746 + $0x2] sm:$0x1]
        %v750 = vld [vmem:[%s746 + $0x3] sm:$0x1]
        %v755 = vlaneseq
        %v756 = vshrl.u32 %v755, 7
        %v757 = vsub.s32 0, %v756
        %v758 = vrot.slane %v747, %v757
        %v759 = vlaneseq
        %v760 = vshrl.u32 %v759, 7
        %v761 = vsub.s32 0, %v760
        %v762 = vrot.slane %v748, %v761
        %v763 = vlaneseq
        %v764 = vshrl.u32 %v763, 7
        %v765 = vsub.s32 0, %v764
        %v766 = vrot.slane %v749, %v765
        %v767 = vlaneseq
        %v768 = vshrl.u32 %v767, 7
        %v769 = vsub.s32 0, %v768
        %v770 = vrot.slane %v750, %v769
        %775 = vmatprep.subr.mxu0 0.0
        %776 = vmatpush1.msra.mxu0 %v697
        %777 = vmatprep.subr.mxu0 0.0
        %778 = vmatpush1.msra.mxu0 %v696
        %779 = vmatprep.subr.mxu0 0.0
        %780 = vmatpush1.msra.mxu0 %v695
        %781 = vmatprep.subr.mxu0 0.0
        %782 = vmatpush1.msra.mxu0 %v694
        %783 = vmatprep.subr.mxu0 0.0
        %784 = vmatpush1.msra.mxu0 %v693
        %785 = vmatprep.subr.mxu0 0.0
        %786 = vmatpush1.msra.mxu0 %v692
        %787 = vmatprep.subr.mxu0 0.0
        %788 = vmatpush1.msra.mxu0 %v691
        %789 = vmatprep.subr.mxu0 0.0
        %790 = vmatpush1.msra.mxu0 %v690
        %791 = vmatprep.subr.mxu0 0.0
        %792 = vmatpush1.msra.mxu0 %v689
        %793 = vmatprep.subr.mxu0 0.0
        %794 = vmatpush1.msra.mxu0 %v688
        %795 = vmatprep.subr.mxu0 0.0
        %796 = vmatpush1.msra.mxu0 %v687
        %797 = vmatprep.subr.mxu0 0.0
        %798 = vmatpush1.msra.mxu0 %v686
        %799 = vmatprep.subr.mxu0 0.0
        %800 = vmatpush1.msra.mxu0 %v685
        %801 = vmatprep.subr.mxu0 0.0
        %802 = vmatpush1.msra.mxu0 %v684
        %803 = vmatprep.subr.mxu0 0.0
        %804 = vmatpush1.msra.mxu0 %v683
        %805 = vmatprep.subr.mxu0 0.0
        %806 = vmatpush1.msra.mxu0 %v682
        %807 = vmatprep.subr.mxu0 0.0
        %808 = vmatpush2.msra.mxu0 0.0
        %809 = vmatprep.subr.mxu0 0.0
        %810 = vmatpush2.msra.mxu0 0.0
        %811 = vmatprep.subr.mxu0 0.0
        %812 = vmatpush2.msra.mxu0 0.0
        %813 = vmatprep.subr.mxu0 0.0
        %814 = vmatpush2.msra.mxu0 0.0
        %815 = vmatprep.subr.mxu0 0.0
        %816 = vmatpush2.msra.mxu0 0.0
        %817 = vmatprep.subr.mxu0 0.0
        %818 = vmatpush2.msra.mxu0 0.0
        %819 = vmatprep.subr.mxu0 0.0
        %820 = vmatpush2.msra.mxu0 0.0
        %821 = vmatprep.subr.mxu0 0.0
        %822 = vmatpush2.msra.mxu0 0.0
        %823 = vmatprep.subr.mxu0 0.0
        %824 = vmatpush2.msra.mxu0 0.0
        %825 = vmatprep.subr.mxu0 0.0
        %826 = vmatpush2.msra.mxu0 0.0
        %827 = vmatprep.subr.mxu0 0.0
        %828 = vmatpush2.msra.mxu0 0.0
        %829 = vmatprep.subr.mxu0 0.0
        %830 = vmatpush2.msra.mxu0 0.0
        %831 = vmatprep.subr.mxu0 0.0
        %832 = vmatpush2.msra.mxu0 0.0
        %833 = vmatprep.subr.mxu0 0.0
        %834 = vmatpush2.msra.mxu0 0.0
        %835 = vmatprep.subr.mxu0 0.0
        %836 = vmatpush2.msra.mxu0 0.0
        %837 = vmatprep.subr.mxu0 0.0
        %838 = vmatpush2.msra.mxu0 0.0
        %839 = vmatprep.mubr.f32.mxu0 0.0
        %840 = vmatmul.mubr.f32.gmra.mxu0 %v301
        %v841 = vpop.f32.mrf.mxu0
        %v842 = vadd.f32 %v758, %v841
        %v843 = vpop.f32.mrf.mxu0
        %844 = vdwg.mxu0
        %845 = vmatprep.subr.mxu0 0.0
        %846 = vmatpush1.msra.mxu0 %v713
        %847 = vmatprep.subr.mxu0 0.0
        %848 = vmatpush1.msra.mxu0 %v712
        %849 = vmatprep.subr.mxu0 0.0
        %850 = vmatpush1.msra.mxu0 %v711
        %851 = vmatprep.subr.mxu0 0.0
        %852 = vmatpush1.msra.mxu0 %v710
        %853 = vmatprep.subr.mxu0 0.0
        %854 = vmatpush1.msra.mxu0 %v709
        %855 = vmatprep.subr.mxu0 0.0
        %856 = vmatpush1.msra.mxu0 %v708
        %857 = vmatprep.subr.mxu0 0.0
        %858 = vmatpush1.msra.mxu0 %v707
        %859 = vmatprep.subr.mxu0 0.0
        %860 = vmatpush1.msra.mxu0 %v706
        %861 = vmatprep.subr.mxu0 0.0
        %862 = vmatpush1.msra.mxu0 %v705
        %863 = vmatprep.subr.mxu0 0.0
        %864 = vmatpush1.msra.mxu0 %v704
        %865 = vmatprep.subr.mxu0 0.0
        %866 = vmatpush1.msra.mxu0 %v703
        %867 = vmatprep.subr.mxu0 0.0
        %868 = vmatpush1.msra.mxu0 %v702
        %869 = vmatprep.subr.mxu0 0.0
        %870 = vmatpush1.msra.mxu0 %v701
        %871 = vmatprep.subr.mxu0 0.0
        %872 = vmatpush1.msra.mxu0 %v700
        %873 = vmatprep.subr.mxu0 0.0
        %874 = vmatpush1.msra.mxu0 %v699
        %875 = vmatprep.subr.mxu0 0.0
        %876 = vmatpush1.msra.mxu0 %v698
        %877 = vmatprep.subr.mxu0 0.0
        %878 = vmatpush2.msra.mxu0 0.0
        %879 = vmatprep.subr.mxu0 0.0
        %880 = vmatpush2.msra.mxu0 0.0
        %881 = vmatprep.subr.mxu0 0.0
        %882 = vmatpush2.msra.mxu0 0.0
        %883 = vmatprep.subr.mxu0 0.0
        %884 = vmatpush2.msra.mxu0 0.0
        %885 = vmatprep.subr.mxu0 0.0
        %886 = vmatpush2.msra.mxu0 0.0
        %887 = vmatprep.subr.mxu0 0.0
        %888 = vmatpush2.msra.mxu0 0.0
        %889 = vmatprep.subr.mxu0 0.0
        %890 = vmatpush2.msra.mxu0 0.0
        %891 = vmatprep.subr.mxu0 0.0
        %892 = vmatpush2.msra.mxu0 0.0
        %893 = vmatprep.subr.mxu0 0.0
        %894 = vmatpush2.msra.mxu0 0.0
        %895 = vmatprep.subr.mxu0 0.0
        %896 = vmatpush2.msra.mxu0 0.0
        %897 = vmatprep.subr.mxu0 0.0
        %898 = vmatpush2.msra.mxu0 0.0
        %899 = vmatprep.subr.mxu0 0.0
        %900 = vmatpush2.msra.mxu0 0.0
        %901 = vmatprep.subr.mxu0 0.0
        %902 = vmatpush2.msra.mxu0 0.0
        %903 = vmatprep.subr.mxu0 0.0
        %904 = vmatpush2.msra.mxu0 0.0
        %905 = vmatprep.subr.mxu0 0.0
        %906 = vmatpush2.msra.mxu0 0.0
        %907 = vmatprep.subr.mxu0 0.0
        %908 = vmatpush2.msra.mxu0 0.0
        %909 = vmatprep.mubr.f32.mxu0 0.0
        %910 = vmatmul.mubr.f32.gmra.mxu0 %v301
        %v911 = vpop.f32.mrf.mxu0
        %v912 = vadd.f32 %v762, %v911
        %v913 = vpop.f32.mrf.mxu0
        %914 = vdwg.mxu0
        %915 = vmatprep.subr.mxu0 0.0
        %916 = vmatpush1.msra.mxu0 %v729
        %917 = vmatprep.subr.mxu0 0.0
        %918 = vmatpush1.msra.mxu0 %v728
        %919 = vmatprep.subr.mxu0 0.0
        %920 = vmatpush1.msra.mxu0 %v727
        %921 = vmatprep.subr.mxu0 0.0
        %922 = vmatpush1.msra.mxu0 %v726
        %923 = vmatprep.subr.mxu0 0.0
        %924 = vmatpush1.msra.mxu0 %v725
        %925 = vmatprep.subr.mxu0 0.0
        %926 = vmatpush1.msra.mxu0 %v724
        %927 = vmatprep.subr.mxu0 0.0
        %928 = vmatpush1.msra.mxu0 %v723
        %929 = vmatprep.subr.mxu0 0.0
        %930 = vmatpush1.msra.mxu0 %v722
        %931 = vmatprep.subr.mxu0 0.0
        %932 = vmatpush1.msra.mxu0 %v721
        %933 = vmatprep.subr.mxu0 0.0
        %934 = vmatpush1.msra.mxu0 %v720
        %935 = vmatprep.subr.mxu0 0.0
        %936 = vmatpush1.msra.mxu0 %v719
        %937 = vmatprep.subr.mxu0 0.0
        %938 = vmatpush1.msra.mxu0 %v718
        %939 = vmatprep.subr.mxu0 0.0
        %940 = vmatpush1.msra.mxu0 %v717
        %941 = vmatprep.subr.mxu0 0.0
        %942 = vmatpush1.msra.mxu0 %v716
        %943 = vmatprep.subr.mxu0 0.0
        %944 = vmatpush1.msra.mxu0 %v715
        %945 = vmatprep.subr.mxu0 0.0
        %946 = vmatpush1.msra.mxu0 %v714
        %947 = vmatprep.subr.mxu0 0.0
        %948 = vmatpush2.msra.mxu0 0.0
        %949 = vmatprep.subr.mxu0 0.0
        %950 = vmatpush2.msra.mxu0 0.0
        %951 = vmatprep.subr.mxu0 0.0
        %952 = vmatpush2.msra.mxu0 0.0
        %953 = vmatprep.subr.mxu0 0.0
        %954 = vmatpush2.msra.mxu0 0.0
        %955 = vmatprep.subr.mxu0 0.0
        %956 = vmatpush2.msra.mxu0 0.0
        %957 = vmatprep.subr.mxu0 0.0
        %958 = vmatpush2.msra.mxu0 0.0
        %959 = vmatprep.subr.mxu0 0.0
        %960 = vmatpush2.msra.mxu0 0.0
        %961 = vmatprep.subr.mxu0 0.0
        %962 = vmatpush2.msra.mxu0 0.0
        %963 = vmatprep.subr.mxu0 0.0
        %964 = vmatpush2.msra.mxu0 0.0
        %965 = vmatprep.subr.mxu0 0.0
        %966 = vmatpush2.msra.mxu0 0.0
        %967 = vmatprep.subr.mxu0 0.0
        %968 = vmatpush2.msra.mxu0 0.0
        %969 = vmatprep.subr.mxu0 0.0
        %970 = vmatpush2.msra.mxu0 0.0
        %971 = vmatprep.subr.mxu0 0.0
        %972 = vmatpush2.msra.mxu0 0.0
        %973 = vmatprep.subr.mxu0 0.0
        %974 = vmatpush2.msra.mxu0 0.0
        %975 = vmatprep.subr.mxu0 0.0
        %976 = vmatpush2.msra.mxu0 0.0
        %977 = vmatprep.subr.mxu0 0.0
        %978 = vmatpush2.msra.mxu0 0.0
        %979 = vmatprep.mubr.f32.mxu0 0.0
        %980 = vmatmul.mubr.f32.gmra.mxu0 %v301
        %v981 = vpop.f32.mrf.mxu0
        %v982 = vadd.f32 %v766, %v981
        %v983 = vpop.f32.mrf.mxu0
        %984 = vdwg.mxu0
        %985 = vmatprep.subr.mxu0 0.0
        %986 = vmatpush1.msra.mxu0 %v745
        %987 = vmatprep.subr.mxu0 0.0
        %988 = vmatpush1.msra.mxu0 %v744
        %989 = vmatprep.subr.mxu0 0.0
        %990 = vmatpush1.msra.mxu0 %v743
        %991 = vmatprep.subr.mxu0 0.0
        %992 = vmatpush1.msra.mxu0 %v742
        %993 = vmatprep.subr.mxu0 0.0
        %994 = vmatpush1.msra.mxu0 %v741
        %995 = vmatprep.subr.mxu0 0.0
        %996 = vmatpush1.msra.mxu0 %v740
        %997 = vmatprep.subr.mxu0 0.0
        %998 = vmatpush1.msra.mxu0 %v739
        %999 = vmatprep.subr.mxu0 0.0
        %1000 = vmatpush1.msra.mxu0 %v738
        %1001 = vmatprep.subr.mxu0 0.0
        %1002 = vmatpush1.msra.mxu0 %v737
        %1003 = vmatprep.subr.mxu0 0.0
        %1004 = vmatpush1.msra.mxu0 %v736
        %1005 = vmatprep.subr.mxu0 0.0
        %1006 = vmatpush1.msra.mxu0 %v735
        %1007 = vmatprep.subr.mxu0 0.0
        %1008 = vmatpush1.msra.mxu0 %v734
        %1009 = vmatprep.subr.mxu0 0.0
        %1010 = vmatpush1.msra.mxu0 %v733
        %1011 = vmatprep.subr.mxu0 0.0
        %1012 = vmatpush1.msra.mxu0 %v732
        %1013 = vmatprep.subr.mxu0 0.0
        %1014 = vmatpush1.msra.mxu0 %v731
        %1015 = vmatprep.subr.mxu0 0.0
        %1016 = vmatpush1.msra.mxu0 %v730
        %1017 = vmatprep.subr.mxu0 0.0
        %1018 = vmatpush2.msra.mxu0 0.0
        %1019 = vmatprep.subr.mxu0 0.0
        %1020 = vmatpush2.msra.mxu0 0.0
        %1021 = vmatprep.subr.mxu0 0.0
        %1022 = vmatpush2.msra.mxu0 0.0
        %1023 = vmatprep.subr.mxu0 0.0
        %1024 = vmatpush2.msra.mxu0 0.0
        %1025 = vmatprep.subr.mxu0 0.0
        %1026 = vmatpush2.msra.mxu0 0.0
        %1027 = vmatprep.subr.mxu0 0.0
        %1028 = vmatpush2.msra.mxu0 0.0
        %1029 = vmatprep.subr.mxu0 0.0
        %1030 = vmatpush2.msra.mxu0 0.0
        %1031 = vmatprep.subr.mxu0 0.0
        %1032 = vmatpush2.msra.mxu0 0.0
        %1033 = vmatprep.subr.mxu0 0.0
        %1034 = vmatpush2.msra.mxu0 0.0
        %1035 = vmatprep.subr.mxu0 0.0
        %1036 = vmatpush2.msra.mxu0 0.0
        %1037 = vmatprep.subr.mxu0 0.0
        %1038 = vmatpush2.msra.mxu0 0.0
        %1039 = vmatprep.subr.mxu0 0.0
        %1040 = vmatpush2.msra.mxu0 0.0
        %1041 = vmatprep.subr.mxu0 0.0
        %1042 = vmatpush2.msra.mxu0 0.0
        %1043 = vmatprep.subr.mxu0 0.0
        %1044 = vmatpush2.msra.mxu0 0.0
        %1045 = vmatprep.subr.mxu0 0.0
        %1046 = vmatpush2.msra.mxu0 0.0
        %1047 = vmatprep.subr.mxu0 0.0
        %1048 = vmatpush2.msra.mxu0 0.0
        %1049 = vmatprep.mubr.f32.mxu0 0.0
        %1050 = vmatmul.mubr.f32.gmra.mxu0 %v301
        %v1051 = vpop.f32.mrf.mxu0
        %v1052 = vadd.f32 %v770, %v1051
        %v1053 = vpop.f32.mrf.mxu0
        %1054 = vdwg.mxu0
        %s1055 = scalar_lea.vmem %s1, 1024
        %v1056 = vld [vmem:[%s1055] sm:$0xff]
        %v1057 = vld [vmem:[%s1055 + $0x8] sm:$0xff]
        %v1058 = vld [vmem:[%s1055 + $0x10] sm:$0xff]
        %v1059 = vld [vmem:[%s1055 + $0x18] sm:$0xff]
        %v1060 = vld [vmem:[%s1055 + $0x20] sm:$0xff]
        %v1061 = vld [vmem:[%s1055 + $0x28] sm:$0xff]
        %v1062 = vld [vmem:[%s1055 + $0x30] sm:$0xff]
        %v1063 = vld [vmem:[%s1055 + $0x38] sm:$0xff]
        %v1064 = vld [vmem:[%s1055 + $0x40] sm:$0xff]
        %v1065 = vld [vmem:[%s1055 + $0x48] sm:$0xff]
        %v1066 = vld [vmem:[%s1055 + $0x50] sm:$0xff]
        %v1067 = vld [vmem:[%s1055 + $0x58] sm:$0xff]
        %v1068 = vld [vmem:[%s1055 + $0x60] sm:$0xff]
        %v1069 = vld [vmem:[%s1055 + $0x68] sm:$0xff]
        %v1070 = vld [vmem:[%s1055 + $0x70] sm:$0xff]
        %v1071 = vld [vmem:[%s1055 + $0x78] sm:$0xff]
        %v1072 = vld [vmem:[%s1055 + $0x80] sm:$0xff]
        %v1073 = vld [vmem:[%s1055 + $0x88] sm:$0xff]
        %v1074 = vld [vmem:[%s1055 + $0x90] sm:$0xff]
        %v1075 = vld [vmem:[%s1055 + $0x98] sm:$0xff]
        %v1076 = vld [vmem:[%s1055 + $0xa0] sm:$0xff]
        %v1077 = vld [vmem:[%s1055 + $0xa8] sm:$0xff]
        %v1078 = vld [vmem:[%s1055 + $0xb0] sm:$0xff]
        %v1079 = vld [vmem:[%s1055 + $0xb8] sm:$0xff]
        %v1080 = vld [vmem:[%s1055 + $0xc0] sm:$0xff]
        %v1081 = vld [vmem:[%s1055 + $0xc8] sm:$0xff]
        %v1082 = vld [vmem:[%s1055 + $0xd0] sm:$0xff]
        %v1083 = vld [vmem:[%s1055 + $0xd8] sm:$0xff]
        %v1084 = vld [vmem:[%s1055 + $0xe0] sm:$0xff]
        %v1085 = vld [vmem:[%s1055 + $0xe8] sm:$0xff]
        %v1086 = vld [vmem:[%s1055 + $0xf0] sm:$0xff]
        %v1087 = vld [vmem:[%s1055 + $0xf8] sm:$0xff]
        %v1088 = vld [vmem:[%s1055 + $0x100] sm:$0xff]
        %v1089 = vld [vmem:[%s1055 + $0x108] sm:$0xff]
        %v1090 = vld [vmem:[%s1055 + $0x110] sm:$0xff]
        %v1091 = vld [vmem:[%s1055 + $0x118] sm:$0xff]
        %v1092 = vld [vmem:[%s1055 + $0x120] sm:$0xff]
        %v1093 = vld [vmem:[%s1055 + $0x128] sm:$0xff]
        %v1094 = vld [vmem:[%s1055 + $0x130] sm:$0xff]
        %v1095 = vld [vmem:[%s1055 + $0x138] sm:$0xff]
        %v1096 = vld [vmem:[%s1055 + $0x140] sm:$0xff]
        %v1097 = vld [vmem:[%s1055 + $0x148] sm:$0xff]
        %v1098 = vld [vmem:[%s1055 + $0x150] sm:$0xff]
        %v1099 = vld [vmem:[%s1055 + $0x158] sm:$0xff]
        %v1100 = vld [vmem:[%s1055 + $0x160] sm:$0xff]
        %v1101 = vld [vmem:[%s1055 + $0x168] sm:$0xff]
        %v1102 = vld [vmem:[%s1055 + $0x170] sm:$0xff]
        %v1103 = vld [vmem:[%s1055 + $0x178] sm:$0xff]
        %v1104 = vld [vmem:[%s1055 + $0x180] sm:$0xff]
        %v1105 = vld [vmem:[%s1055 + $0x188] sm:$0xff]
        %v1106 = vld [vmem:[%s1055 + $0x190] sm:$0xff]
        %v1107 = vld [vmem:[%s1055 + $0x198] sm:$0xff]
        %v1108 = vld [vmem:[%s1055 + $0x1a0] sm:$0xff]
        %v1109 = vld [vmem:[%s1055 + $0x1a8] sm:$0xff]
        %v1110 = vld [vmem:[%s1055 + $0x1b0] sm:$0xff]
        %v1111 = vld [vmem:[%s1055 + $0x1b8] sm:$0xff]
        %v1112 = vld [vmem:[%s1055 + $0x1c0] sm:$0xff]
        %v1113 = vld [vmem:[%s1055 + $0x1c8] sm:$0xff]
        %v1114 = vld [vmem:[%s1055 + $0x1d0] sm:$0xff]
        %v1115 = vld [vmem:[%s1055 + $0x1d8] sm:$0xff]
        %v1116 = vld [vmem:[%s1055 + $0x1e0] sm:$0xff]
        %v1117 = vld [vmem:[%s1055 + $0x1e8] sm:$0xff]
        %v1118 = vld [vmem:[%s1055 + $0x1f0] sm:$0xff]
        %v1119 = vld [vmem:[%s1055 + $0x1f8] sm:$0xff]
        %s1120 = scalar_lea.vmem %s2, 8
        %v1121 = vld [vmem:[%s1120] sm:$0x1]
        %v1122 = vld [vmem:[%s1120 + $0x1] sm:$0x1]
        %v1123 = vld [vmem:[%s1120 + $0x2] sm:$0x1]
        %v1124 = vld [vmem:[%s1120 + $0x3] sm:$0x1]
        %v1129 = vlaneseq
        %v1130 = vshrl.u32 %v1129, 7
        %v1131 = vsub.s32 0, %v1130
        %v1132 = vrot.slane %v1121, %v1131
        %v1133 = vlaneseq
        %v1134 = vshrl.u32 %v1133, 7
        %v1135 = vsub.s32 0, %v1134
        %v1136 = vrot.slane %v1122, %v1135
        %v1137 = vlaneseq
        %v1138 = vshrl.u32 %v1137, 7
        %v1139 = vsub.s32 0, %v1138
        %v1140 = vrot.slane %v1123, %v1139
        %v1141 = vlaneseq
        %v1142 = vshrl.u32 %v1141, 7
        %v1143 = vsub.s32 0, %v1142
        %v1144 = vrot.slane %v1124, %v1143
        %1149 = vmatprep.subr.mxu0 0.0
        %1150 = vmatpush1.msra.mxu0 %v1071
        %1151 = vmatprep.subr.mxu0 0.0
        %1152 = vmatpush1.msra.mxu0 %v1070
        %1153 = vmatprep.subr.mxu0 0.0
        %1154 = vmatpush1.msra.mxu0 %v1069
        %1155 = vmatprep.subr.mxu0 0.0
        %1156 = vmatpush1.msra.mxu0 %v1068
        %1157 = vmatprep.subr.mxu0 0.0
        %1158 = vmatpush1.msra.mxu0 %v1067
        %1159 = vmatprep.subr.mxu0 0.0
        %1160 = vmatpush1.msra.mxu0 %v1066
        %1161 = vmatprep.subr.mxu0 0.0
        %1162 = vmatpush1.msra.mxu0 %v1065
        %1163 = vmatprep.subr.mxu0 0.0
        %1164 = vmatpush1.msra.mxu0 %v1064
        %1165 = vmatprep.subr.mxu0 0.0
        %1166 = vmatpush1.msra.mxu0 %v1063
        %1167 = vmatprep.subr.mxu0 0.0
        %1168 = vmatpush1.msra.mxu0 %v1062
        %1169 = vmatprep.subr.mxu0 0.0
        %1170 = vmatpush1.msra.mxu0 %v1061
        %1171 = vmatprep.subr.mxu0 0.0
        %1172 = vmatpush1.msra.mxu0 %v1060
        %1173 = vmatprep.subr.mxu0 0.0
        %1174 = vmatpush1.msra.mxu0 %v1059
        %1175 = vmatprep.subr.mxu0 0.0
        %1176 = vmatpush1.msra.mxu0 %v1058
        %1177 = vmatprep.subr.mxu0 0.0
        %1178 = vmatpush1.msra.mxu0 %v1057
        %1179 = vmatprep.subr.mxu0 0.0
        %1180 = vmatpush1.msra.mxu0 %v1056
        %1181 = vmatprep.subr.mxu0 0.0
        %1182 = vmatpush2.msra.mxu0 0.0
        %1183 = vmatprep.subr.mxu0 0.0
        %1184 = vmatpush2.msra.mxu0 0.0
        %1185 = vmatprep.subr.mxu0 0.0
        %1186 = vmatpush2.msra.mxu0 0.0
        %1187 = vmatprep.subr.mxu0 0.0
        %1188 = vmatpush2.msra.mxu0 0.0
        %1189 = vmatprep.subr.mxu0 0.0
        %1190 = vmatpush2.msra.mxu0 0.0
        %1191 = vmatprep.subr.mxu0 0.0
        %1192 = vmatpush2.msra.mxu0 0.0
        %1193 = vmatprep.subr.mxu0 0.0
        %1194 = vmatpush2.msra.mxu0 0.0
        %1195 = vmatprep.subr.mxu0 0.0
        %1196 = vmatpush2.msra.mxu0 0.0
        %1197 = vmatprep.subr.mxu0 0.0
        %1198 = vmatpush2.msra.mxu0 0.0
        %1199 = vmatprep.subr.mxu0 0.0
        %1200 = vmatpush2.msra.mxu0 0.0
        %1201 = vmatprep.subr.mxu0 0.0
        %1202 = vmatpush2.msra.mxu0 0.0
        %1203 = vmatprep.subr.mxu0 0.0
        %1204 = vmatpush2.msra.mxu0 0.0
        %1205 = vmatprep.subr.mxu0 0.0
        %1206 = vmatpush2.msra.mxu0 0.0
        %1207 = vmatprep.subr.mxu0 0.0
        %1208 = vmatpush2.msra.mxu0 0.0
        %1209 = vmatprep.subr.mxu0 0.0
        %1210 = vmatpush2.msra.mxu0 0.0
        %1211 = vmatprep.subr.mxu0 0.0
        %1212 = vmatpush2.msra.mxu0 0.0
        %1213 = vmatprep.mubr.f32.mxu0 0.0
        %1214 = vmatmul.mubr.f32.gmra.mxu0 %v301
        %v1215 = vpop.f32.mrf.mxu0
        %v1216 = vadd.f32 %v1132, %v1215
        %v1217 = vpop.f32.mrf.mxu0
        %1218 = vdwg.mxu0
        %1219 = vmatprep.subr.mxu0 0.0
        %1220 = vmatpush1.msra.mxu0 %v1087
        %1221 = vmatprep.subr.mxu0 0.0
        %1222 = vmatpush1.msra.mxu0 %v1086
        %1223 = vmatprep.subr.mxu0 0.0
        %1224 = vmatpush1.msra.mxu0 %v1085
        %1225 = vmatprep.subr.mxu0 0.0
        %1226 = vmatpush1.msra.mxu0 %v1084
        %1227 = vmatprep.subr.mxu0 0.0
        %1228 = vmatpush1.msra.mxu0 %v1083
        %1229 = vmatprep.subr.mxu0 0.0
        %1230 = vmatpush1.msra.mxu0 %v1082
        %1231 = vmatprep.subr.mxu0 0.0
        %1232 = vmatpush1.msra.mxu0 %v1081
        %1233 = vmatprep.subr.mxu0 0.0
        %1234 = vmatpush1.msra.mxu0 %v1080
        %1235 = vmatprep.subr.mxu0 0.0
        %1236 = vmatpush1.msra.mxu0 %v1079
        %1237 = vmatprep.subr.mxu0 0.0
        %1238 = vmatpush1.msra.mxu0 %v1078
        %1239 = vmatprep.subr.mxu0 0.0
        %1240 = vmatpush1.msra.mxu0 %v1077
        %1241 = vmatprep.subr.mxu0 0.0
        %1242 = vmatpush1.msra.mxu0 %v1076
        %1243 = vmatprep.subr.mxu0 0.0
        %1244 = vmatpush1.msra.mxu0 %v1075
        %1245 = vmatprep.subr.mxu0 0.0
        %1246 = vmatpush1.msra.mxu0 %v1074
        %1247 = vmatprep.subr.mxu0 0.0
        %1248 = vmatpush1.msra.mxu0 %v1073
        %1249 = vmatprep.subr.mxu0 0.0
        %1250 = vmatpush1.msra.mxu0 %v1072
        %1251 = vmatprep.subr.mxu0 0.0
        %1252 = vmatpush2.msra.mxu0 0.0
        %1253 = vmatprep.subr.mxu0 0.0
        %1254 = vmatpush2.msra.mxu0 0.0
        %1255 = vmatprep.subr.mxu0 0.0
        %1256 = vmatpush2.msra.mxu0 0.0
        %1257 = vmatprep.subr.mxu0 0.0
        %1258 = vmatpush2.msra.mxu0 0.0
        %1259 = vmatprep.subr.mxu0 0.0
        %1260 = vmatpush2.msra.mxu0 0.0
        %1261 = vmatprep.subr.mxu0 0.0
        %1262 = vmatpush2.msra.mxu0 0.0
        %1263 = vmatprep.subr.mxu0 0.0
        %1264 = vmatpush2.msra.mxu0 0.0
        %1265 = vmatprep.subr.mxu0 0.0
        %1266 = vmatpush2.msra.mxu0 0.0
        %1267 = vmatprep.subr.mxu0 0.0
        %1268 = vmatpush2.msra.mxu0 0.0
        %1269 = vmatprep.subr.mxu0 0.0
        %1270 = vmatpush2.msra.mxu0 0.0
        %1271 = vmatprep.subr.mxu0 0.0
        %1272 = vmatpush2.msra.mxu0 0.0
        %1273 = vmatprep.subr.mxu0 0.0
        %1274 = vmatpush2.msra.mxu0 0.0
        %1275 = vmatprep.subr.mxu0 0.0
        %1276 = vmatpush2.msra.mxu0 0.0
        %1277 = vmatprep.subr.mxu0 0.0
        %1278 = vmatpush2.msra.mxu0 0.0
        %1279 = vmatprep.subr.mxu0 0.0
        %1280 = vmatpush2.msra.mxu0 0.0
        %1281 = vmatprep.subr.mxu0 0.0
        %1282 = vmatpush2.msra.mxu0 0.0
        %1283 = vmatprep.mubr.f32.mxu0 0.0
        %1284 = vmatmul.mubr.f32.gmra.mxu0 %v301
        %v1285 = vpop.f32.mrf.mxu0
        %v1286 = vadd.f32 %v1136, %v1285
        %v1287 = vpop.f32.mrf.mxu0
        %1288 = vdwg.mxu0
        %1289 = vmatprep.subr.mxu0 0.0
        %1290 = vmatpush1.msra.mxu0 %v1103
        %1291 = vmatprep.subr.mxu0 0.0
        %1292 = vmatpush1.msra.mxu0 %v1102
        %1293 = vmatprep.subr.mxu0 0.0
        %1294 = vmatpush1.msra.mxu0 %v1101
        %1295 = vmatprep.subr.mxu0 0.0
        %1296 = vmatpush1.msra.mxu0 %v1100
        %1297 = vmatprep.subr.mxu0 0.0
        %1298 = vmatpush1.msra.mxu0 %v1099
        %1299 = vmatprep.subr.mxu0 0.0
        %1300 = vmatpush1.msra.mxu0 %v1098
        %1301 = vmatprep.subr.mxu0 0.0
        %1302 = vmatpush1.msra.mxu0 %v1097
        %1303 = vmatprep.subr.mxu0 0.0
        %1304 = vmatpush1.msra.mxu0 %v1096
        %1305 = vmatprep.subr.mxu0 0.0
        %1306 = vmatpush1.msra.mxu0 %v1095
        %1307 = vmatprep.subr.mxu0 0.0
        %1308 = vmatpush1.msra.mxu0 %v1094
        %1309 = vmatprep.subr.mxu0 0.0
        %1310 = vmatpush1.msra.mxu0 %v1093
        %1311 = vmatprep.subr.mxu0 0.0
        %1312 = vmatpush1.msra.mxu0 %v1092
        %1313 = vmatprep.subr.mxu0 0.0
        %1314 = vmatpush1.msra.mxu0 %v1091
        %1315 = vmatprep.subr.mxu0 0.0
        %1316 = vmatpush1.msra.mxu0 %v1090
        %1317 = vmatprep.subr.mxu0 0.0
        %1318 = vmatpush1.msra.mxu0 %v1089
        %1319 = vmatprep.subr.mxu0 0.0
        %1320 = vmatpush1.msra.mxu0 %v1088
        %1321 = vmatprep.subr.mxu0 0.0
        %1322 = vmatpush2.msra.mxu0 0.0
        %1323 = vmatprep.subr.mxu0 0.0
        %1324 = vmatpush2.msra.mxu0 0.0
        %1325 = vmatprep.subr.mxu0 0.0
        %1326 = vmatpush2.msra.mxu0 0.0
        %1327 = vmatprep.subr.mxu0 0.0
        %1328 = vmatpush2.msra.mxu0 0.0
        %1329 = vmatprep.subr.mxu0 0.0
        %1330 = vmatpush2.msra.mxu0 0.0
        %1331 = vmatprep.subr.mxu0 0.0
        %1332 = vmatpush2.msra.mxu0 0.0
        %1333 = vmatprep.subr.mxu0 0.0
        %1334 = vmatpush2.msra.mxu0 0.0
        %1335 = vmatprep.subr.mxu0 0.0
        %1336 = vmatpush2.msra.mxu0 0.0
        %1337 = vmatprep.subr.mxu0 0.0
        %1338 = vmatpush2.msra.mxu0 0.0
        %1339 = vmatprep.subr.mxu0 0.0
        %1340 = vmatpush2.msra.mxu0 0.0
        %1341 = vmatprep.subr.mxu0 0.0
        %1342 = vmatpush2.msra.mxu0 0.0
        %1343 = vmatprep.subr.mxu0 0.0
        %1344 = vmatpush2.msra.mxu0 0.0
        %1345 = vmatprep.subr.mxu0 0.0
        %1346 = vmatpush2.msra.mxu0 0.0
        %1347 = vmatprep.subr.mxu0 0.0
        %1348 = vmatpush2.msra.mxu0 0.0
        %1349 = vmatprep.subr.mxu0 0.0
        %1350 = vmatpush2.msra.mxu0 0.0
        %1351 = vmatprep.subr.mxu0 0.0
        %1352 = vmatpush2.msra.mxu0 0.0
        %1353 = vmatprep.mubr.f32.mxu0 0.0
        %1354 = vmatmul.mubr.f32.gmra.mxu0 %v301
        %v1355 = vpop.f32.mrf.mxu0
        %v1356 = vadd.f32 %v1140, %v1355
        %v1357 = vpop.f32.mrf.mxu0
        %1358 = vdwg.mxu0
        %1359 = vmatprep.subr.mxu0 0.0
        %1360 = vmatpush1.msra.mxu0 %v1119
        %1361 = vmatprep.subr.mxu0 0.0
        %1362 = vmatpush1.msra.mxu0 %v1118
        %1363 = vmatprep.subr.mxu0 0.0
        %1364 = vmatpush1.msra.mxu0 %v1117
        %1365 = vmatprep.subr.mxu0 0.0
        %1366 = vmatpush1.msra.mxu0 %v1116
        %1367 = vmatprep.subr.mxu0 0.0
        %1368 = vmatpush1.msra.mxu0 %v1115
        %1369 = vmatprep.subr.mxu0 0.0
        %1370 = vmatpush1.msra.mxu0 %v1114
        %1371 = vmatprep.subr.mxu0 0.0
        %1372 = vmatpush1.msra.mxu0 %v1113
        %1373 = vmatprep.subr.mxu0 0.0
        %1374 = vmatpush1.msra.mxu0 %v1112
        %1375 = vmatprep.subr.mxu0 0.0
        %1376 = vmatpush1.msra.mxu0 %v1111
        %1377 = vmatprep.subr.mxu0 0.0
        %1378 = vmatpush1.msra.mxu0 %v1110
        %1379 = vmatprep.subr.mxu0 0.0
        %1380 = vmatpush1.msra.mxu0 %v1109
        %1381 = vmatprep.subr.mxu0 0.0
        %1382 = vmatpush1.msra.mxu0 %v1108
        %1383 = vmatprep.subr.mxu0 0.0
        %1384 = vmatpush1.msra.mxu0 %v1107
        %1385 = vmatprep.subr.mxu0 0.0
        %1386 = vmatpush1.msra.mxu0 %v1106
        %1387 = vmatprep.subr.mxu0 0.0
        %1388 = vmatpush1.msra.mxu0 %v1105
        %1389 = vmatprep.subr.mxu0 0.0
        %1390 = vmatpush1.msra.mxu0 %v1104
        %1391 = vmatprep.subr.mxu0 0.0
        %1392 = vmatpush2.msra.mxu0 0.0
        %1393 = vmatprep.subr.mxu0 0.0
        %1394 = vmatpush2.msra.mxu0 0.0
        %1395 = vmatprep.subr.mxu0 0.0
        %1396 = vmatpush2.msra.mxu0 0.0
        %1397 = vmatprep.subr.mxu0 0.0
        %1398 = vmatpush2.msra.mxu0 0.0
        %1399 = vmatprep.subr.mxu0 0.0
        %1400 = vmatpush2.msra.mxu0 0.0
        %1401 = vmatprep.subr.mxu0 0.0
        %1402 = vmatpush2.msra.mxu0 0.0
        %1403 = vmatprep.subr.mxu0 0.0
        %1404 = vmatpush2.msra.mxu0 0.0
        %1405 = vmatprep.subr.mxu0 0.0
        %1406 = vmatpush2.msra.mxu0 0.0
        %1407 = vmatprep.subr.mxu0 0.0
        %1408 = vmatpush2.msra.mxu0 0.0
        %1409 = vmatprep.subr.mxu0 0.0
        %1410 = vmatpush2.msra.mxu0 0.0
        %1411 = vmatprep.subr.mxu0 0.0
        %1412 = vmatpush2.msra.mxu0 0.0
        %1413 = vmatprep.subr.mxu0 0.0
        %1414 = vmatpush2.msra.mxu0 0.0
        %1415 = vmatprep.subr.mxu0 0.0
        %1416 = vmatpush2.msra.mxu0 0.0
        %1417 = vmatprep.subr.mxu0 0.0
        %1418 = vmatpush2.msra.mxu0 0.0
        %1419 = vmatprep.subr.mxu0 0.0
        %1420 = vmatpush2.msra.mxu0 0.0
        %1421 = vmatprep.subr.mxu0 0.0
        %1422 = vmatpush2.msra.mxu0 0.0
        %1423 = vmatprep.mubr.f32.mxu0 0.0
        %1424 = vmatmul.mubr.f32.gmra.mxu0 %v301
        %v1425 = vpop.f32.mrf.mxu0
        %v1426 = vadd.f32 %v1144, %v1425
        %v1427 = vpop.f32.mrf.mxu0
        %1428 = vdwg.mxu0
        %vm1429 = vcmask 64512
        %v1431 = vsel %vm1429, %v468, 0
        %v1434 = vsel %vm1429, %v842, 0
        %1436 = vmatprep.subr.mxu0 0.0
        %1437 = vmatpush1.xpose.msra.mxu0 0.0
        %1438 = vmatprep.subr.mxu0 0.0
        %1439 = vmatpush1.xpose.msra.mxu0 0.0
        %1440 = vmatprep.subr.mxu0 0.0
        %1441 = vmatpush1.xpose.msra.mxu0 0.0
        %1442 = vmatprep.subr.mxu0 0.0
        %1443 = vmatpush1.xpose.msra.mxu0 0.0
        %1444 = vmatprep.subr.mxu0 0.0
        %1445 = vmatpush1.xpose.msra.mxu0 0.0
        %1446 = vmatprep.subr.mxu0 0.0
        %1447 = vmatpush1.xpose.msra.mxu0 0.0
        %1448 = vmatprep.subr.mxu0 0.0
        %1449 = vmatpush1.xpose.msra.mxu0 0.0
        %1450 = vmatprep.subr.mxu0 0.0
        %1451 = vmatpush1.xpose.msra.mxu0 0.0
        %1452 = vmatprep.subr.mxu0 0.0
        %1453 = vmatpush1.xpose.msra.mxu0 0.0
        %1454 = vmatprep.subr.mxu0 0.0
        %1455 = vmatpush1.xpose.msra.mxu0 0.0
        %1456 = vmatprep.subr.mxu0 0.0
        %1457 = vmatpush1.xpose.msra.mxu0 0.0
        %1458 = vmatprep.subr.mxu0 0.0
        %1459 = vmatpush1.xpose.msra.mxu0 0.0
        %1460 = vmatprep.subr.mxu0 0.0
        %1461 = vmatpush1.xpose.msra.mxu0 0.0
        %1462 = vmatprep.subr.mxu0 0.0
        %1463 = vmatpush1.xpose.msra.mxu0 0.0
        %1464 = vmatprep.subr.mxu0 0.0
        %1465 = vmatpush1.xpose.msra.mxu0 0.0
        %1466 = vmatprep.subr.mxu0 0.0
        %1467 = vmatpush1.xpose.msra.mxu0 %v1434
        %1468 = vmatprep.subr.mxu0 0.0
        %1469 = vmatpush2.xpose.msra.mxu0 0.0
        %1470 = vmatprep.subr.mxu0 0.0
        %1471 = vmatpush2.xpose.msra.mxu0 0.0
        %1472 = vmatprep.subr.mxu0 0.0
        %1473 = vmatpush2.xpose.msra.mxu0 0.0
        %1474 = vmatprep.subr.mxu0 0.0
        %1475 = vmatpush2.xpose.msra.mxu0 0.0
        %1476 = vmatprep.subr.mxu0 0.0
        %1477 = vmatpush2.xpose.msra.mxu0 0.0
        %1478 = vmatprep.subr.mxu0 0.0
        %1479 = vmatpush2.xpose.msra.mxu0 0.0
        %1480 = vmatprep.subr.mxu0 0.0
        %1481 = vmatpush2.xpose.msra.mxu0 0.0
        %1482 = vmatprep.subr.mxu0 0.0
        %1483 = vmatpush2.xpose.msra.mxu0 0.0
        %1484 = vmatprep.subr.mxu0 0.0
        %1485 = vmatpush2.xpose.msra.mxu0 0.0
        %1486 = vmatprep.subr.mxu0 0.0
        %1487 = vmatpush2.xpose.msra.mxu0 0.0
        %1488 = vmatprep.subr.mxu0 0.0
        %1489 = vmatpush2.xpose.msra.mxu0 0.0
        %1490 = vmatprep.subr.mxu0 0.0
        %1491 = vmatpush2.xpose.msra.mxu0 0.0
        %1492 = vmatprep.subr.mxu0 0.0
        %1493 = vmatpush2.xpose.msra.mxu0 0.0
        %1494 = vmatprep.subr.mxu0 0.0
        %1495 = vmatpush2.xpose.msra.mxu0 0.0
        %1496 = vmatprep.subr.mxu0 0.0
        %1497 = vmatpush2.xpose.msra.mxu0 0.0
        %1498 = vmatprep.subr.mxu0 0.0
        %1499 = vmatpush2.xpose.msra.mxu0 0.0
        %1500 = vmatprep.mubr.f32.mxu0 0.0
        %1501 = vmatmul.mubr.f32.gmra.mxu0 %v1431
        %v1502 = vpop.f32.mrf.mxu0
        %v1503 = vadd.f32 0.0, %v1502
        %v1504 = vpop.f32.mrf.mxu0
        %1505 = vdwg.mxu0
        %v1507 = vsel %vm1429, %v538, 0
        %v1510 = vsel %vm1429, %v912, 0
        %1512 = vmatprep.subr.mxu0 0.0
        %1513 = vmatpush1.xpose.msra.mxu0 0.0
        %1514 = vmatprep.subr.mxu0 0.0
        %1515 = vmatpush1.xpose.msra.mxu0 0.0
        %1516 = vmatprep.subr.mxu0 0.0
        %1517 = vmatpush1.xpose.msra.mxu0 0.0
        %1518 = vmatprep.subr.mxu0 0.0
        %1519 = vmatpush1.xpose.msra.mxu0 0.0
        %1520 = vmatprep.subr.mxu0 0.0
        %1521 = vmatpush1.xpose.msra.mxu0 0.0
        %1522 = vmatprep.subr.mxu0 0.0
        %1523 = vmatpush1.xpose.msra.mxu0 0.0
        %1524 = vmatprep.subr.mxu0 0.0
        %1525 = vmatpush1.xpose.msra.mxu0 0.0
        %1526 = vmatprep.subr.mxu0 0.0
        %1527 = vmatpush1.xpose.msra.mxu0 0.0
        %1528 = vmatprep.subr.mxu0 0.0
        %1529 = vmatpush1.xpose.msra.mxu0 0.0
        %1530 = vmatprep.subr.mxu0 0.0
        %1531 = vmatpush1.xpose.msra.mxu0 0.0
        %1532 = vmatprep.subr.mxu0 0.0
        %1533 = vmatpush1.xpose.msra.mxu0 0.0
        %1534 = vmatprep.subr.mxu0 0.0
        %1535 = vmatpush1.xpose.msra.mxu0 0.0
        %1536 = vmatprep.subr.mxu0 0.0
        %1537 = vmatpush1.xpose.msra.mxu0 0.0
        %1538 = vmatprep.subr.mxu0 0.0
        %1539 = vmatpush1.xpose.msra.mxu0 0.0
        %1540 = vmatprep.subr.mxu0 0.0
        %1541 = vmatpush1.xpose.msra.mxu0 0.0
        %1542 = vmatprep.subr.mxu0 0.0
        %1543 = vmatpush1.xpose.msra.mxu0 %v1510
        %1544 = vmatprep.subr.mxu0 0.0
        %1545 = vmatpush2.xpose.msra.mxu0 0.0
        %1546 = vmatprep.subr.mxu0 0.0
        %1547 = vmatpush2.xpose.msra.mxu0 0.0
        %1548 = vmatprep.subr.mxu0 0.0
        %1549 = vmatpush2.xpose.msra.mxu0 0.0
        %1550 = vmatprep.subr.mxu0 0.0
        %1551 = vmatpush2.xpose.msra.mxu0 0.0
        %1552 = vmatprep.subr.mxu0 0.0
        %1553 = vmatpush2.xpose.msra.mxu0 0.0
        %1554 = vmatprep.subr.mxu0 0.0
        %1555 = vmatpush2.xpose.msra.mxu0 0.0
        %1556 = vmatprep.subr.mxu0 0.0
        %1557 = vmatpush2.xpose.msra.mxu0 0.0
        %1558 = vmatprep.subr.mxu0 0.0
        %1559 = vmatpush2.xpose.msra.mxu0 0.0
        %1560 = vmatprep.subr.mxu0 0.0
        %1561 = vmatpush2.xpose.msra.mxu0 0.0
        %1562 = vmatprep.subr.mxu0 0.0
        %1563 = vmatpush2.xpose.msra.mxu0 0.0
        %1564 = vmatprep.subr.mxu0 0.0
        %1565 = vmatpush2.xpose.msra.mxu0 0.0
        %1566 = vmatprep.subr.mxu0 0.0
        %1567 = vmatpush2.xpose.msra.mxu0 0.0
        %1568 = vmatprep.subr.mxu0 0.0
        %1569 = vmatpush2.xpose.msra.mxu0 0.0
        %1570 = vmatprep.subr.mxu0 0.0
        %1571 = vmatpush2.xpose.msra.mxu0 0.0
        %1572 = vmatprep.subr.mxu0 0.0
        %1573 = vmatpush2.xpose.msra.mxu0 0.0
        %1574 = vmatprep.subr.mxu0 0.0
        %1575 = vmatpush2.xpose.msra.mxu0 0.0
        %1576 = vmatprep.mubr.f32.mxu0 0.0
        %1577 = vmatmul.mubr.f32.gmra.mxu0 %v1507
        %v1578 = vpop.f32.mrf.mxu0
        %v1579 = vadd.f32 0.0, %v1578
        %v1580 = vpop.f32.mrf.mxu0
        %1581 = vdwg.mxu0
        %v1583 = vsel %vm1429, %v608, 0
        %v1586 = vsel %vm1429, %v982, 0
        %1588 = vmatprep.subr.mxu0 0.0
        %1589 = vmatpush1.xpose.msra.mxu0 0.0
        %1590 = vmatprep.subr.mxu0 0.0
        %1591 = vmatpush1.xpose.msra.mxu0 0.0
        %1592 = vmatprep.subr.mxu0 0.0
        %1593 = vmatpush1.xpose.msra.mxu0 0.0
        %1594 = vmatprep.subr.mxu0 0.0
        %1595 = vmatpush1.xpose.msra.mxu0 0.0
        %1596 = vmatprep.subr.mxu0 0.0
        %1597 = vmatpush1.xpose.msra.mxu0 0.0
        %1598 = vmatprep.subr.mxu0 0.0
        %1599 = vmatpush1.xpose.msra.mxu0 0.0
        %1600 = vmatprep.subr.mxu0 0.0
        %1601 = vmatpush1.xpose.msra.mxu0 0.0
        %1602 = vmatprep.subr.mxu0 0.0
        %1603 = vmatpush1.xpose.msra.mxu0 0.0
        %1604 = vmatprep.subr.mxu0 0.0
        %1605 = vmatpush1.xpose.msra.mxu0 0.0
        %1606 = vmatprep.subr.mxu0 0.0
        %1607 = vmatpush1.xpose.msra.mxu0 0.0
        %1608 = vmatprep.subr.mxu0 0.0
        %1609 = vmatpush1.xpose.msra.mxu0 0.0
        %1610 = vmatprep.subr.mxu0 0.0
        %1611 = vmatpush1.xpose.msra.mxu0 0.0
        %1612 = vmatprep.subr.mxu0 0.0
        %1613 = vmatpush1.xpose.msra.mxu0 0.0
        %1614 = vmatprep.subr.mxu0 0.0
        %1615 = vmatpush1.xpose.msra.mxu0 0.0
        %1616 = vmatprep.subr.mxu0 0.0
        %1617 = vmatpush1.xpose.msra.mxu0 0.0
        %1618 = vmatprep.subr.mxu0 0.0
        %1619 = vmatpush1.xpose.msra.mxu0 %v1586
        %1620 = vmatprep.subr.mxu0 0.0
        %1621 = vmatpush2.xpose.msra.mxu0 0.0
        %1622 = vmatprep.subr.mxu0 0.0
        %1623 = vmatpush2.xpose.msra.mxu0 0.0
        %1624 = vmatprep.subr.mxu0 0.0
        %1625 = vmatpush2.xpose.msra.mxu0 0.0
        %1626 = vmatprep.subr.mxu0 0.0
        %1627 = vmatpush2.xpose.msra.mxu0 0.0
        %1628 = vmatprep.subr.mxu0 0.0
        %1629 = vmatpush2.xpose.msra.mxu0 0.0
        %1630 = vmatprep.subr.mxu0 0.0
        %1631 = vmatpush2.xpose.msra.mxu0 0.0
        %1632 = vmatprep.subr.mxu0 0.0
        %1633 = vmatpush2.xpose.msra.mxu0 0.0
        %1634 = vmatprep.subr.mxu0 0.0
        %1635 = vmatpush2.xpose.msra.mxu0 0.0
        %1636 = vmatprep.subr.mxu0 0.0
        %1637 = vmatpush2.xpose.msra.mxu0 0.0
        %1638 = vmatprep.subr.mxu0 0.0
        %1639 = vmatpush2.xpose.msra.mxu0 0.0
        %1640 = vmatprep.subr.mxu0 0.0
        %1641 = vmatpush2.xpose.msra.mxu0 0.0
        %1642 = vmatprep.subr.mxu0 0.0
        %1643 = vmatpush2.xpose.msra.mxu0 0.0
        %1644 = vmatprep.subr.mxu0 0.0
        %1645 = vmatpush2.xpose.msra.mxu0 0.0
        %1646 = vmatprep.subr.mxu0 0.0
        %1647 = vmatpush2.xpose.msra.mxu0 0.0
        %1648 = vmatprep.subr.mxu0 0.0
        %1649 = vmatpush2.xpose.msra.mxu0 0.0
        %1650 = vmatprep.subr.mxu0 0.0
        %1651 = vmatpush2.xpose.msra.mxu0 0.0
        %1652 = vmatprep.mubr.f32.mxu0 0.0
        %1653 = vmatmul.mubr.f32.gmra.mxu0 %v1583
        %v1654 = vpop.f32.mrf.mxu0
        %v1655 = vadd.f32 0.0, %v1654
        %v1656 = vpop.f32.mrf.mxu0
        %1657 = vdwg.mxu0
        %v1659 = vsel %vm1429, %v678, 0
        %v1662 = vsel %vm1429, %v1052, 0
        %1664 = vmatprep.subr.mxu0 0.0
        %1665 = vmatpush1.xpose.msra.mxu0 0.0
        %1666 = vmatprep.subr.mxu0 0.0
        %1667 = vmatpush1.xpose.msra.mxu0 0.0
        %1668 = vmatprep.subr.mxu0 0.0
        %1669 = vmatpush1.xpose.msra.mxu0 0.0
        %1670 = vmatprep.subr.mxu0 0.0
        %1671 = vmatpush1.xpose.msra.mxu0 0.0
        %1672 = vmatprep.subr.mxu0 0.0
        %1673 = vmatpush1.xpose.msra.mxu0 0.0
        %1674 = vmatprep.subr.mxu0 0.0
        %1675 = vmatpush1.xpose.msra.mxu0 0.0
        %1676 = vmatprep.subr.mxu0 0.0
        %1677 = vmatpush1.xpose.msra.mxu0 0.0
        %1678 = vmatprep.subr.mxu0 0.0
        %1679 = vmatpush1.xpose.msra.mxu0 0.0
        %1680 = vmatprep.subr.mxu0 0.0
        %1681 = vmatpush1.xpose.msra.mxu0 0.0
        %1682 = vmatprep.subr.mxu0 0.0
        %1683 = vmatpush1.xpose.msra.mxu0 0.0
        %1684 = vmatprep.subr.mxu0 0.0
        %1685 = vmatpush1.xpose.msra.mxu0 0.0
        %1686 = vmatprep.subr.mxu0 0.0
        %1687 = vmatpush1.xpose.msra.mxu0 0.0
        %1688 = vmatprep.subr.mxu0 0.0
        %1689 = vmatpush1.xpose.msra.mxu0 0.0
        %1690 = vmatprep.subr.mxu0 0.0
        %1691 = vmatpush1.xpose.msra.mxu0 0.0
        %1692 = vmatprep.subr.mxu0 0.0
        %1693 = vmatpush1.xpose.msra.mxu0 0.0
        %1694 = vmatprep.subr.mxu0 0.0
        %1695 = vmatpush1.xpose.msra.mxu0 %v1662
        %1696 = vmatprep.subr.mxu0 0.0
        %1697 = vmatpush2.xpose.msra.mxu0 0.0
        %1698 = vmatprep.subr.mxu0 0.0
        %1699 = vmatpush2.xpose.msra.mxu0 0.0
        %1700 = vmatprep.subr.mxu0 0.0
        %1701 = vmatpush2.xpose.msra.mxu0 0.0
        %1702 = vmatprep.subr.mxu0 0.0
        %1703 = vmatpush2.xpose.msra.mxu0 0.0
        %1704 = vmatprep.subr.mxu0 0.0
        %1705 = vmatpush2.xpose.msra.mxu0 0.0
        %1706 = vmatprep.subr.mxu0 0.0
        %1707 = vmatpush2.xpose.msra.mxu0 0.0
        %1708 = vmatprep.subr.mxu0 0.0
        %1709 = vmatpush2.xpose.msra.mxu0 0.0
        %1710 = vmatprep.subr.mxu0 0.0
        %1711 = vmatpush2.xpose.msra.mxu0 0.0
        %1712 = vmatprep.subr.mxu0 0.0
        %1713 = vmatpush2.xpose.msra.mxu0 0.0
        %1714 = vmatprep.subr.mxu0 0.0
        %1715 = vmatpush2.xpose.msra.mxu0 0.0
        %1716 = vmatprep.subr.mxu0 0.0
        %1717 = vmatpush2.xpose.msra.mxu0 0.0
        %1718 = vmatprep.subr.mxu0 0.0
        %1719 = vmatpush2.xpose.msra.mxu0 0.0
        %1720 = vmatprep.subr.mxu0 0.0
        %1721 = vmatpush2.xpose.msra.mxu0 0.0
        %1722 = vmatprep.subr.mxu0 0.0
        %1723 = vmatpush2.xpose.msra.mxu0 0.0
        %1724 = vmatprep.subr.mxu0 0.0
        %1725 = vmatpush2.xpose.msra.mxu0 0.0
        %1726 = vmatprep.subr.mxu0 0.0
        %1727 = vmatpush2.xpose.msra.mxu0 0.0
        %1728 = vmatprep.mubr.f32.mxu0 0.0
        %1729 = vmatmul.mubr.f32.gmra.mxu0 %v1659
        %v1730 = vpop.f32.mrf.mxu0
        %v1731 = vadd.f32 0.0, %v1730
        %v1732 = vpop.f32.mrf.mxu0
        %1733 = vdwg.mxu0
        %v1734 = vmul.f32 %v1503, 0.35355338
        %v1735 = vmul.f32 %v1579, 0.35355338
        %v1736 = vmul.f32 %v1655, 0.35355338
        %v1737 = vmul.f32 %v1731, 0.35355338
        %v1738 = vsel %vm1429, %v1734, -inf
        %1739 = vmax.xlane.f32.xlu0 %v1738
        %v1740 = vpop.xlane.xlu0 %1739
        %v1741 = vsel %vm1429, %v1735, -inf
        %1742 = vmax.xlane.f32.xlu0 %v1741
        %v1743 = vpop.xlane.xlu0 %1742
        %v1744 = vsel %vm1429, %v1736, -inf
        %1745 = vmax.xlane.f32.xlu0 %v1744
        %v1746 = vpop.xlane.xlu0 %1745
        %v1747 = vsel %vm1429, %v1737, -inf
        %1748 = vmax.xlane.f32.xlu0 %v1747
        %v1749 = vpop.xlane.xlu0 %1748
        %v1750 = vsub.f32 %v1734, %v1740
        %v1751 = vsub.f32 %v1735, %v1743
        %v1752 = vsub.f32 %v1736, %v1746
        %v1753 = vsub.f32 %v1737, %v1749
        %v1754 = vmul.f32 %v1750, 1.442695
        %v1755 = vpow.pop %v1754
        %v1756 = vmul.f32 %v1751, 1.442695
        %v1757 = vpow.pop %v1756
        %v1758 = vmul.f32 %v1752, 1.442695
        %v1759 = vpow.pop %v1758
        %v1760 = vmul.f32 %v1753, 1.442695
        %v1761 = vpow.pop %v1760
        %v1762 = vsel %vm1429, %v1755, 0.0
        %1763 = vadd.xlane.f32.xlu0 %v1762
        %v1764 = vpop.xlane.xlu0 %1763
        %v1765 = vsel %vm1429, %v1757, 0.0
        %1766 = vadd.xlane.f32.xlu0 %v1765
        %v1767 = vpop.xlane.xlu0 %1766
        %v1768 = vsel %vm1429, %v1759, 0.0
        %1769 = vadd.xlane.f32.xlu0 %v1768
        %v1770 = vpop.xlane.xlu0 %1769
        %v1771 = vsel %vm1429, %v1761, 0.0
        %1772 = vadd.xlane.f32.xlu0 %v1771
        %v1773 = vpop.xlane.xlu0 %1772
        %v1774 = vrcp.pop %v1764
        %v1775 = vmul.f32 %v1755, %v1774
        %v1776 = vrcp.pop %v1767
        %v1777 = vmul.f32 %v1757, %v1776
        %v1778 = vrcp.pop %v1770
        %v1779 = vmul.f32 %v1759, %v1778
        %v1780 = vrcp.pop %v1773
        %v1781 = vmul.f32 %v1761, %v1780
        %v1783 = vsel %vm1429, %v1775, 0
        %1785 = vmatprep.subr.mxu0 0.0
        %1786 = vmatpush1.msra.mxu0 0.0
        %1787 = vmatprep.subr.mxu0 0.0
        %1788 = vmatpush1.msra.mxu0 0.0
        %1789 = vmatprep.subr.mxu0 0.0
        %1790 = vmatpush1.msra.mxu0 0.0
        %1791 = vmatprep.subr.mxu0 0.0
        %1792 = vmatpush1.msra.mxu0 0.0
        %1793 = vmatprep.subr.mxu0 0.0
        %1794 = vmatpush1.msra.mxu0 0.0
        %1795 = vmatprep.subr.mxu0 0.0
        %1796 = vmatpush1.msra.mxu0 0.0
        %1797 = vmatprep.subr.mxu0 0.0
        %1798 = vmatpush1.msra.mxu0 0.0
        %1799 = vmatprep.subr.mxu0 0.0
        %1800 = vmatpush1.msra.mxu0 0.0
        %1801 = vmatprep.subr.mxu0 0.0
        %1802 = vmatpush1.msra.mxu0 0.0
        %1803 = vmatprep.subr.mxu0 0.0
        %1804 = vmatpush1.msra.mxu0 0.0
        %1805 = vmatprep.subr.mxu0 0.0
        %1806 = vmatpush1.msra.mxu0 0.0
        %1807 = vmatprep.subr.mxu0 0.0
        %1808 = vmatpush1.msra.mxu0 0.0
        %1809 = vmatprep.subr.mxu0 0.0
        %1810 = vmatpush1.msra.mxu0 0.0
        %1811 = vmatprep.subr.mxu0 0.0
        %1812 = vmatpush1.msra.mxu0 0.0
        %1813 = vmatprep.subr.mxu0 0.0
        %1814 = vmatpush1.msra.mxu0 0.0
        %1815 = vmatprep.subr.mxu0 0.0
        %1816 = vmatpush1.msra.mxu0 %v1216
        %1817 = vmatprep.subr.mxu0 0.0
        %1818 = vmatpush2.msra.mxu0 0.0
        %1819 = vmatprep.subr.mxu0 0.0
        %1820 = vmatpush2.msra.mxu0 0.0
        %1821 = vmatprep.subr.mxu0 0.0
        %1822 = vmatpush2.msra.mxu0 0.0
        %1823 = vmatprep.subr.mxu0 0.0
        %1824 = vmatpush2.msra.mxu0 0.0
        %1825 = vmatprep.subr.mxu0 0.0
        %1826 = vmatpush2.msra.mxu0 0.0
        %1827 = vmatprep.subr.mxu0 0.0
        %1828 = vmatpush2.msra.mxu0 0.0
        %1829 = vmatprep.subr.mxu0 0.0
        %1830 = vmatpush2.msra.mxu0 0.0
        %1831 = vmatprep.subr.mxu0 0.0
        %1832 = vmatpush2.msra.mxu0 0.0
        %1833 = vmatprep.subr.mxu0 0.0
        %1834 = vmatpush2.msra.mxu0 0.0
        %1835 = vmatprep.subr.mxu0 0.0
        %1836 = vmatpush2.msra.mxu0 0.0
        %1837 = vmatprep.subr.mxu0 0.0
        %1838 = vmatpush2.msra.mxu0 0.0
        %1839 = vmatprep.subr.mxu0 0.0
        %1840 = vmatpush2.msra.mxu0 0.0
        %1841 = vmatprep.subr.mxu0 0.0
        %1842 = vmatpush2.msra.mxu0 0.0
        %1843 = vmatprep.subr.mxu0 0.0
        %1844 = vmatpush2.msra.mxu0 0.0
        %1845 = vmatprep.subr.mxu0 0.0
        %1846 = vmatpush2.msra.mxu0 0.0
        %1847 = vmatprep.subr.mxu0 0.0
        %1848 = vmatpush2.msra.mxu0 0.0
        %1849 = vmatprep.mubr.f32.mxu0 0.0
        %1850 = vmatmul.mubr.f32.gmra.mxu0 %v1783
        %v1851 = vpop.f32.mrf.mxu0
        %v1852 = vadd.f32 0.0, %v1851
        %v1853 = vpop.f32.mrf.mxu0
        %1854 = vdwg.mxu0
        %v1856 = vsel %vm1429, %v1777, 0
        %1858 = vmatprep.subr.mxu0 0.0
        %1859 = vmatpush1.msra.mxu0 0.0
        %1860 = vmatprep.subr.mxu0 0.0
        %1861 = vmatpush1.msra.mxu0 0.0
        %1862 = vmatprep.subr.mxu0 0.0
        %1863 = vmatpush1.msra.mxu0 0.0
        %1864 = vmatprep.subr.mxu0 0.0
        %1865 = vmatpush1.msra.mxu0 0.0
        %1866 = vmatprep.subr.mxu0 0.0
        %1867 = vmatpush1.msra.mxu0 0.0
        %1868 = vmatprep.subr.mxu0 0.0
        %1869 = vmatpush1.msra.mxu0 0.0
        %1870 = vmatprep.subr.mxu0 0.0
        %1871 = vmatpush1.msra.mxu0 0.0
        %1872 = vmatprep.subr.mxu0 0.0
        %1873 = vmatpush1.msra.mxu0 0.0
        %1874 = vmatprep.subr.mxu0 0.0
        %1875 = vmatpush1.msra.mxu0 0.0
        %1876 = vmatprep.subr.mxu0 0.0
        %1877 = vmatpush1.msra.mxu0 0.0
        %1878 = vmatprep.subr.mxu0 0.0
        %1879 = vmatpush1.msra.mxu0 0.0
        %1880 = vmatprep.subr.mxu0 0.0
        %1881 = vmatpush1.msra.mxu0 0.0
        %1882 = vmatprep.subr.mxu0 0.0
        %1883 = vmatpush1.msra.mxu0 0.0
        %1884 = vmatprep.subr.mxu0 0.0
        %1885 = vmatpush1.msra.mxu0 0.0
        %1886 = vmatprep.subr.mxu0 0.0
        %1887 = vmatpush1.msra.mxu0 0.0
        %1888 = vmatprep.subr.mxu0 0.0
        %1889 = vmatpush1.msra.mxu0 %v1286
        %1890 = vmatprep.subr.mxu0 0.0
        %1891 = vmatpush2.msra.mxu0 0.0
        %1892 = vmatprep.subr.mxu0 0.0
        %1893 = vmatpush2.msra.mxu0 0.0
        %1894 = vmatprep.subr.mxu0 0.0
        %1895 = vmatpush2.msra.mxu0 0.0
        %1896 = vmatprep.subr.mxu0 0.0
        %1897 = vmatpush2.msra.mxu0 0.0
        %1898 = vmatprep.subr.mxu0 0.0
        %1899 = vmatpush2.msra.mxu0 0.0
        %1900 = vmatprep.subr.mxu0 0.0
        %1901 = vmatpush2.msra.mxu0 0.0
        %1902 = vmatprep.subr.mxu0 0.0
        %1903 = vmatpush2.msra.mxu0 0.0
        %1904 = vmatprep.subr.mxu0 0.0
        %1905 = vmatpush2.msra.mxu0 0.0
        %1906 = vmatprep.subr.mxu0 0.0
        %1907 = vmatpush2.msra.mxu0 0.0
        %1908 = vmatprep.subr.mxu0 0.0
        %1909 = vmatpush2.msra.mxu0 0.0
        %1910 = vmatprep.subr.mxu0 0.0
        %1911 = vmatpush2.msra.mxu0 0.0
        %1912 = vmatprep.subr.mxu0 0.0
        %1913 = vmatpush2.msra.mxu0 0.0
        %1914 = vmatprep.subr.mxu0 0.0
        %1915 = vmatpush2.msra.mxu0 0.0
        %1916 = vmatprep.subr.mxu0 0.0
        %1917 = vmatpush2.msra.mxu0 0.0
        %1918 = vmatprep.subr.mxu0 0.0
        %1919 = vmatpush2.msra.mxu0 0.0
        %1920 = vmatprep.subr.mxu0 0.0
        %1921 = vmatpush2.msra.mxu0 0.0
        %1922 = vmatprep.mubr.f32.mxu0 0.0
        %1923 = vmatmul.mubr.f32.gmra.mxu0 %v1856
        %v1924 = vpop.f32.mrf.mxu0
        %v1925 = vadd.f32 0.0, %v1924
        %v1926 = vpop.f32.mrf.mxu0
        %1927 = vdwg.mxu0
        %v1929 = vsel %vm1429, %v1779, 0
        %1931 = vmatprep.subr.mxu0 0.0
        %1932 = vmatpush1.msra.mxu0 0.0
        %1933 = vmatprep.subr.mxu0 0.0
        %1934 = vmatpush1.msra.mxu0 0.0
        %1935 = vmatprep.subr.mxu0 0.0
        %1936 = vmatpush1.msra.mxu0 0.0
        %1937 = vmatprep.subr.mxu0 0.0
        %1938 = vmatpush1.msra.mxu0 0.0
        %1939 = vmatprep.subr.mxu0 0.0
        %1940 = vmatpush1.msra.mxu0 0.0
        %1941 = vmatprep.subr.mxu0 0.0
        %1942 = vmatpush1.msra.mxu0 0.0
        %1943 = vmatprep.subr.mxu0 0.0
        %1944 = vmatpush1.msra.mxu0 0.0
        %1945 = vmatprep.subr.mxu0 0.0
        %1946 = vmatpush1.msra.mxu0 0.0
        %1947 = vmatprep.subr.mxu0 0.0
        %1948 = vmatpush1.msra.mxu0 0.0
        %1949 = vmatprep.subr.mxu0 0.0
        %1950 = vmatpush1.msra.mxu0 0.0
        %1951 = vmatprep.subr.mxu0 0.0
        %1952 = vmatpush1.msra.mxu0 0.0
        %1953 = vmatprep.subr.mxu0 0.0
        %1954 = vmatpush1.msra.mxu0 0.0
        %1955 = vmatprep.subr.mxu0 0.0
        %1956 = vmatpush1.msra.mxu0 0.0
        %1957 = vmatprep.subr.mxu0 0.0
        %1958 = vmatpush1.msra.mxu0 0.0
        %1959 = vmatprep.subr.mxu0 0.0
        %1960 = vmatpush1.msra.mxu0 0.0
        %1961 = vmatprep.subr.mxu0 0.0
        %1962 = vmatpush1.msra.mxu0 %v1356
        %1963 = vmatprep.subr.mxu0 0.0
        %1964 = vmatpush2.msra.mxu0 0.0
        %1965 = vmatprep.subr.mxu0 0.0
        %1966 = vmatpush2.msra.mxu0 0.0
        %1967 = vmatprep.subr.mxu0 0.0
        %1968 = vmatpush2.msra.mxu0 0.0
        %1969 = vmatprep.subr.mxu0 0.0
        %1970 = vmatpush2.msra.mxu0 0.0
        %1971 = vmatprep.subr.mxu0 0.0
        %1972 = vmatpush2.msra.mxu0 0.0
        %1973 = vmatprep.subr.mxu0 0.0
        %1974 = vmatpush2.msra.mxu0 0.0
        %1975 = vmatprep.subr.mxu0 0.0
        %1976 = vmatpush2.msra.mxu0 0.0
        %1977 = vmatprep.subr.mxu0 0.0
        %1978 = vmatpush2.msra.mxu0 0.0
        %1979 = vmatprep.subr.mxu0 0.0
        %1980 = vmatpush2.msra.mxu0 0.0
        %1981 = vmatprep.subr.mxu0 0.0
        %1982 = vmatpush2.msra.mxu0 0.0
        %1983 = vmatprep.subr.mxu0 0.0
        %1984 = vmatpush2.msra.mxu0 0.0
        %1985 = vmatprep.subr.mxu0 0.0
        %1986 = vmatpush2.msra.mxu0 0.0
        %1987 = vmatprep.subr.mxu0 0.0
        %1988 = vmatpush2.msra.mxu0 0.0
        %1989 = vmatprep.subr.mxu0 0.0
        %1990 = vmatpush2.msra.mxu0 0.0
        %1991 = vmatprep.subr.mxu0 0.0
        %1992 = vmatpush2.msra.mxu0 0.0
        %1993 = vmatprep.subr.mxu0 0.0
        %1994 = vmatpush2.msra.mxu0 0.0
        %1995 = vmatprep.mubr.f32.mxu0 0.0
        %1996 = vmatmul.mubr.f32.gmra.mxu0 %v1929
        %v1997 = vpop.f32.mrf.mxu0
        %v1998 = vadd.f32 0.0, %v1997
        %v1999 = vpop.f32.mrf.mxu0
        %2000 = vdwg.mxu0
        %v2002 = vsel %vm1429, %v1781, 0
        %2004 = vmatprep.subr.mxu0 0.0
        %2005 = vmatpush1.msra.mxu0 0.0
        %2006 = vmatprep.subr.mxu0 0.0
        %2007 = vmatpush1.msra.mxu0 0.0
        %2008 = vmatprep.subr.mxu0 0.0
        %2009 = vmatpush1.msra.mxu0 0.0
        %2010 = vmatprep.subr.mxu0 0.0
        %2011 = vmatpush1.msra.mxu0 0.0
        %2012 = vmatprep.subr.mxu0 0.0
        %2013 = vmatpush1.msra.mxu0 0.0
        %2014 = vmatprep.subr.mxu0 0.0
        %2015 = vmatpush1.msra.mxu0 0.0
        %2016 = vmatprep.subr.mxu0 0.0
        %2017 = vmatpush1.msra.mxu0 0.0
        %2018 = vmatprep.subr.mxu0 0.0
        %2019 = vmatpush1.msra.mxu0 0.0
        %2020 = vmatprep.subr.mxu0 0.0
        %2021 = vmatpush1.msra.mxu0 0.0
        %2022 = vmatprep.subr.mxu0 0.0
        %2023 = vmatpush1.msra.mxu0 0.0
        %2024 = vmatprep.subr.mxu0 0.0
        %2025 = vmatpush1.msra.mxu0 0.0
        %2026 = vmatprep.subr.mxu0 0.0
        %2027 = vmatpush1.msra.mxu0 0.0
        %2028 = vmatprep.subr.mxu0 0.0
        %2029 = vmatpush1.msra.mxu0 0.0
        %2030 = vmatprep.subr.mxu0 0.0
        %2031 = vmatpush1.msra.mxu0 0.0
        %2032 = vmatprep.subr.mxu0 0.0
        %2033 = vmatpush1.msra.mxu0 0.0
        %2034 = vmatprep.subr.mxu0 0.0
        %2035 = vmatpush1.msra.mxu0 %v1426
        %2036 = vmatprep.subr.mxu0 0.0
        %2037 = vmatpush2.msra.mxu0 0.0
        %2038 = vmatprep.subr.mxu0 0.0
        %2039 = vmatpush2.msra.mxu0 0.0
        %2040 = vmatprep.subr.mxu0 0.0
        %2041 = vmatpush2.msra.mxu0 0.0
        %2042 = vmatprep.subr.mxu0 0.0
        %2043 = vmatpush2.msra.mxu0 0.0
        %2044 = vmatprep.subr.mxu0 0.0
        %2045 = vmatpush2.msra.mxu0 0.0
        %2046 = vmatprep.subr.mxu0 0.0
        %2047 = vmatpush2.msra.mxu0 0.0
        %2048 = vmatprep.subr.mxu0 0.0
        %2049 = vmatpush2.msra.mxu0 0.0
        %2050 = vmatprep.subr.mxu0 0.0
        %2051 = vmatpush2.msra.mxu0 0.0
        %2052 = vmatprep.subr.mxu0 0.0
        %2053 = vmatpush2.msra.mxu0 0.0
        %2054 = vmatprep.subr.mxu0 0.0
        %2055 = vmatpush2.msra.mxu0 0.0
        %2056 = vmatprep.subr.mxu0 0.0
        %2057 = vmatpush2.msra.mxu0 0.0
        %2058 = vmatprep.subr.mxu0 0.0
        %2059 = vmatpush2.msra.mxu0 0.0
        %2060 = vmatprep.subr.mxu0 0.0
        %2061 = vmatpush2.msra.mxu0 0.0
        %2062 = vmatprep.subr.mxu0 0.0
        %2063 = vmatpush2.msra.mxu0 0.0
        %2064 = vmatprep.subr.mxu0 0.0
        %2065 = vmatpush2.msra.mxu0 0.0
        %2066 = vmatprep.subr.mxu0 0.0
        %2067 = vmatpush2.msra.mxu0 0.0
        %2068 = vmatprep.mubr.f32.mxu0 0.0
        %2069 = vmatmul.mubr.f32.gmra.mxu0 %v2002
        %v2070 = vpop.f32.mrf.mxu0
        %v2071 = vadd.f32 0.0, %v2070
        %v2072 = vpop.f32.mrf.mxu0
        %2073 = vdwg.mxu0
        %v2074 = vld [vmem:[%s3] sm:$0xff]
        %v2075 = vld [vmem:[%s3 + $0x8] sm:$0xff]
        %v2076 = vld [vmem:[%s3 + $0x10] sm:$0xff]
        %v2077 = vld [vmem:[%s3 + $0x18] sm:$0xff]
        %v2079 = vsel %vm1429, %v1852, 0
        %2081 = vmatprep.subr.mxu0 0.0
        %2082 = vmatpush1.msra.mxu0 0.0
        %2083 = vmatprep.subr.mxu0 0.0
        %2084 = vmatpush1.msra.mxu0 0.0
        %2085 = vmatprep.subr.mxu0 0.0
        %2086 = vmatpush1.msra.mxu0 0.0
        %2087 = vmatprep.subr.mxu0 0.0
        %2088 = vmatpush1.msra.mxu0 0.0
        %2089 = vmatprep.subr.mxu0 0.0
        %2090 = vmatpush1.msra.mxu0 0.0
        %2091 = vmatprep.subr.mxu0 0.0
        %2092 = vmatpush1.msra.mxu0 0.0
        %2093 = vmatprep.subr.mxu0 0.0
        %2094 = vmatpush1.msra.mxu0 0.0
        %2095 = vmatprep.subr.mxu0 0.0
        %2096 = vmatpush1.msra.mxu0 0.0
        %2097 = vmatprep.subr.mxu0 0.0
        %2098 = vmatpush1.msra.mxu0 0.0
        %2099 = vmatprep.subr.mxu0 0.0
        %2100 = vmatpush1.msra.mxu0 0.0
        %2101 = vmatprep.subr.mxu0 0.0
        %2102 = vmatpush1.msra.mxu0 0.0
        %2103 = vmatprep.subr.mxu0 0.0
        %2104 = vmatpush1.msra.mxu0 0.0
        %2105 = vmatprep.subr.mxu0 0.0
        %2106 = vmatpush1.msra.mxu0 0.0
        %2107 = vmatprep.subr.mxu0 0.0
        %2108 = vmatpush1.msra.mxu0 0.0
        %2109 = vmatprep.subr.mxu0 0.0
        %2110 = vmatpush1.msra.mxu0 0.0
        %2111 = vmatprep.subr.mxu0 0.0
        %2112 = vmatpush1.msra.mxu0 %v2074
        %2113 = vmatprep.subr.mxu0 0.0
        %2114 = vmatpush2.msra.mxu0 0.0
        %2115 = vmatprep.subr.mxu0 0.0
        %2116 = vmatpush2.msra.mxu0 0.0
        %2117 = vmatprep.subr.mxu0 0.0
        %2118 = vmatpush2.msra.mxu0 0.0
        %2119 = vmatprep.subr.mxu0 0.0
        %2120 = vmatpush2.msra.mxu0 0.0
        %2121 = vmatprep.subr.mxu0 0.0
        %2122 = vmatpush2.msra.mxu0 0.0
        %2123 = vmatprep.subr.mxu0 0.0
        %2124 = vmatpush2.msra.mxu0 0.0
        %2125 = vmatprep.subr.mxu0 0.0
        %2126 = vmatpush2.msra.mxu0 0.0
        %2127 = vmatprep.subr.mxu0 0.0
        %2128 = vmatpush2.msra.mxu0 0.0
        %2129 = vmatprep.subr.mxu0 0.0
        %2130 = vmatpush2.msra.mxu0 0.0
        %2131 = vmatprep.subr.mxu0 0.0
        %2132 = vmatpush2.msra.mxu0 0.0
        %2133 = vmatprep.subr.mxu0 0.0
        %2134 = vmatpush2.msra.mxu0 0.0
        %2135 = vmatprep.subr.mxu0 0.0
        %2136 = vmatpush2.msra.mxu0 0.0
        %2137 = vmatprep.subr.mxu0 0.0
        %2138 = vmatpush2.msra.mxu0 0.0
        %2139 = vmatprep.subr.mxu0 0.0
        %2140 = vmatpush2.msra.mxu0 0.0
        %2141 = vmatprep.subr.mxu0 0.0
        %2142 = vmatpush2.msra.mxu0 0.0
        %2143 = vmatprep.subr.mxu0 0.0
        %2144 = vmatpush2.msra.mxu0 0.0
        %2145 = vmatprep.mubr.f32.mxu0 0.0
        %2146 = vmatmul.mubr.f32.gmra.mxu0 %v2079
        %v2147 = vpop.f32.mrf.mxu0
        %v2148 = vadd.f32 0.0, %v2147
        %v2149 = vpop.f32.mrf.mxu0
        %2150 = vdwg.mxu0
        %v2152 = vsel %vm1429, %v1925, 0
        %2154 = vmatprep.subr.mxu0 0.0
        %2155 = vmatpush1.msra.mxu0 0.0
        %2156 = vmatprep.subr.mxu0 0.0
        %2157 = vmatpush1.msra.mxu0 0.0
        %2158 = vmatprep.subr.mxu0 0.0
        %2159 = vmatpush1.msra.mxu0 0.0
        %2160 = vmatprep.subr.mxu0 0.0
        %2161 = vmatpush1.msra.mxu0 0.0
        %2162 = vmatprep.subr.mxu0 0.0
        %2163 = vmatpush1.msra.mxu0 0.0
        %2164 = vmatprep.subr.mxu0 0.0
        %2165 = vmatpush1.msra.mxu0 0.0
        %2166 = vmatprep.subr.mxu0 0.0
        %2167 = vmatpush1.msra.mxu0 0.0
        %2168 = vmatprep.subr.mxu0 0.0
        %2169 = vmatpush1.msra.mxu0 0.0
        %2170 = vmatprep.subr.mxu0 0.0
        %2171 = vmatpush1.msra.mxu0 0.0
        %2172 = vmatprep.subr.mxu0 0.0
        %2173 = vmatpush1.msra.mxu0 0.0
        %2174 = vmatprep.subr.mxu0 0.0
        %2175 = vmatpush1.msra.mxu0 0.0
        %2176 = vmatprep.subr.mxu0 0.0
        %2177 = vmatpush1.msra.mxu0 0.0
        %2178 = vmatprep.subr.mxu0 0.0
        %2179 = vmatpush1.msra.mxu0 0.0
        %2180 = vmatprep.subr.mxu0 0.0
        %2181 = vmatpush1.msra.mxu0 0.0
        %2182 = vmatprep.subr.mxu0 0.0
        %2183 = vmatpush1.msra.mxu0 0.0
        %2184 = vmatprep.subr.mxu0 0.0
        %2185 = vmatpush1.msra.mxu0 %v2075
        %2186 = vmatprep.subr.mxu0 0.0
        %2187 = vmatpush2.msra.mxu0 0.0
        %2188 = vmatprep.subr.mxu0 0.0
        %2189 = vmatpush2.msra.mxu0 0.0
        %2190 = vmatprep.subr.mxu0 0.0
        %2191 = vmatpush2.msra.mxu0 0.0
        %2192 = vmatprep.subr.mxu0 0.0
        %2193 = vmatpush2.msra.mxu0 0.0
        %2194 = vmatprep.subr.mxu0 0.0
        %2195 = vmatpush2.msra.mxu0 0.0
        %2196 = vmatprep.subr.mxu0 0.0
        %2197 = vmatpush2.msra.mxu0 0.0
        %2198 = vmatprep.subr.mxu0 0.0
        %2199 = vmatpush2.msra.mxu0 0.0
        %2200 = vmatprep.subr.mxu0 0.0
        %2201 = vmatpush2.msra.mxu0 0.0
        %2202 = vmatprep.subr.mxu0 0.0
        %2203 = vmatpush2.msra.mxu0 0.0
        %2204 = vmatprep.subr.mxu0 0.0
        %2205 = vmatpush2.msra.mxu0 0.0
        %2206 = vmatprep.subr.mxu0 0.0
        %2207 = vmatpush2.msra.mxu0 0.0
        %2208 = vmatprep.subr.mxu0 0.0
        %2209 = vmatpush2.msra.mxu0 0.0
        %2210 = vmatprep.subr.mxu0 0.0
        %2211 = vmatpush2.msra.mxu0 0.0
        %2212 = vmatprep.subr.mxu0 0.0
        %2213 = vmatpush2.msra.mxu0 0.0
        %2214 = vmatprep.subr.mxu0 0.0
        %2215 = vmatpush2.msra.mxu0 0.0
        %2216 = vmatprep.subr.mxu0 0.0
        %2217 = vmatpush2.msra.mxu0 0.0
        %2218 = vmatprep.mubr.f32.mxu0 0.0
        %2219 = vmatmul.mubr.f32.gmra.mxu0 %v2152
        %v2220 = vpop.f32.mrf.mxu0
        %v2221 = vadd.f32 0.0, %v2220
        %v2222 = vpop.f32.mrf.mxu0
        %2223 = vdwg.mxu0
        %v2225 = vsel %vm1429, %v1998, 0
        %2227 = vmatprep.subr.mxu0 0.0
        %2228 = vmatpush1.msra.mxu0 0.0
        %2229 = vmatprep.subr.mxu0 0.0
        %2230 = vmatpush1.msra.mxu0 0.0
        %2231 = vmatprep.subr.mxu0 0.0
        %2232 = vmatpush1.msra.mxu0 0.0
        %2233 = vmatprep.subr.mxu0 0.0
        %2234 = vmatpush1.msra.mxu0 0.0
        %2235 = vmatprep.subr.mxu0 0.0
        %2236 = vmatpush1.msra.mxu0 0.0
        %2237 = vmatprep.subr.mxu0 0.0
        %2238 = vmatpush1.msra.mxu0 0.0
        %2239 = vmatprep.subr.mxu0 0.0
        %2240 = vmatpush1.msra.mxu0 0.0
        %2241 = vmatprep.subr.mxu0 0.0
        %2242 = vmatpush1.msra.mxu0 0.0
        %2243 = vmatprep.subr.mxu0 0.0
        %2244 = vmatpush1.msra.mxu0 0.0
        %2245 = vmatprep.subr.mxu0 0.0
        %2246 = vmatpush1.msra.mxu0 0.0
        %2247 = vmatprep.subr.mxu0 0.0
        %2248 = vmatpush1.msra.mxu0 0.0
        %2249 = vmatprep.subr.mxu0 0.0
        %2250 = vmatpush1.msra.mxu0 0.0
        %2251 = vmatprep.subr.mxu0 0.0
        %2252 = vmatpush1.msra.mxu0 0.0
        %2253 = vmatprep.subr.mxu0 0.0
        %2254 = vmatpush1.msra.mxu0 0.0
        %2255 = vmatprep.subr.mxu0 0.0
        %2256 = vmatpush1.msra.mxu0 0.0
        %2257 = vmatprep.subr.mxu0 0.0
        %2258 = vmatpush1.msra.mxu0 %v2076
        %2259 = vmatprep.subr.mxu0 0.0
        %2260 = vmatpush2.msra.mxu0 0.0
        %2261 = vmatprep.subr.mxu0 0.0
        %2262 = vmatpush2.msra.mxu0 0.0
        %2263 = vmatprep.subr.mxu0 0.0
        %2264 = vmatpush2.msra.mxu0 0.0
        %2265 = vmatprep.subr.mxu0 0.0
        %2266 = vmatpush2.msra.mxu0 0.0
        %2267 = vmatprep.subr.mxu0 0.0
        %2268 = vmatpush2.msra.mxu0 0.0
        %2269 = vmatprep.subr.mxu0 0.0
        %2270 = vmatpush2.msra.mxu0 0.0
        %2271 = vmatprep.subr.mxu0 0.0
        %2272 = vmatpush2.msra.mxu0 0.0
        %2273 = vmatprep.subr.mxu0 0.0
        %2274 = vmatpush2.msra.mxu0 0.0
        %2275 = vmatprep.subr.mxu0 0.0
        %2276 = vmatpush2.msra.mxu0 0.0
        %2277 = vmatprep.subr.mxu0 0.0
        %2278 = vmatpush2.msra.mxu0 0.0
        %2279 = vmatprep.subr.mxu0 0.0
        %2280 = vmatpush2.msra.mxu0 0.0
        %2281 = vmatprep.subr.mxu0 0.0
        %2282 = vmatpush2.msra.mxu0 0.0
        %2283 = vmatprep.subr.mxu0 0.0
        %2284 = vmatpush2.msra.mxu0 0.0
        %2285 = vmatprep.subr.mxu0 0.0
        %2286 = vmatpush2.msra.mxu0 0.0
        %2287 = vmatprep.subr.mxu0 0.0
        %2288 = vmatpush2.msra.mxu0 0.0
        %2289 = vmatprep.subr.mxu0 0.0
        %2290 = vmatpush2.msra.mxu0 0.0
        %2291 = vmatprep.mubr.f32.mxu0 0.0
        %2292 = vmatmul.mubr.f32.gmra.mxu0 %v2225
        %v2293 = vpop.f32.mrf.mxu0
        %v2294 = vadd.f32 0.0, %v2293
        %v2295 = vpop.f32.mrf.mxu0
        %2296 = vdwg.mxu0
        %v2298 = vsel %vm1429, %v2071, 0
        %2300 = vmatprep.subr.mxu0 0.0
        %2301 = vmatpush1.msra.mxu0 0.0
        %2302 = vmatprep.subr.mxu0 0.0
        %2303 = vmatpush1.msra.mxu0 0.0
        %2304 = vmatprep.subr.mxu0 0.0
        %2305 = vmatpush1.msra.mxu0 0.0
        %2306 = vmatprep.subr.mxu0 0.0
        %2307 = vmatpush1.msra.mxu0 0.0
        %2308 = vmatprep.subr.mxu0 0.0
        %2309 = vmatpush1.msra.mxu0 0.0
        %2310 = vmatprep.subr.mxu0 0.0
        %2311 = vmatpush1.msra.mxu0 0.0
        %2312 = vmatprep.subr.mxu0 0.0
        %2313 = vmatpush1.msra.mxu0 0.0
        %2314 = vmatprep.subr.mxu0 0.0
        %2315 = vmatpush1.msra.mxu0 0.0
        %2316 = vmatprep.subr.mxu0 0.0
        %2317 = vmatpush1.msra.mxu0 0.0
        %2318 = vmatprep.subr.mxu0 0.0
        %2319 = vmatpush1.msra.mxu0 0.0
        %2320 = vmatprep.subr.mxu0 0.0
        %2321 = vmatpush1.msra.mxu0 0.0
        %2322 = vmatprep.subr.mxu0 0.0
        %2323 = vmatpush1.msra.mxu0 0.0
        %2324 = vmatprep.subr.mxu0 0.0
        %2325 = vmatpush1.msra.mxu0 0.0
        %2326 = vmatprep.subr.mxu0 0.0
        %2327 = vmatpush1.msra.mxu0 0.0
        %2328 = vmatprep.subr.mxu0 0.0
        %2329 = vmatpush1.msra.mxu0 0.0
        %2330 = vmatprep.subr.mxu0 0.0
        %2331 = vmatpush1.msra.mxu0 %v2077
        %2332 = vmatprep.subr.mxu0 0.0
        %2333 = vmatpush2.msra.mxu0 0.0
        %2334 = vmatprep.subr.mxu0 0.0
        %2335 = vmatpush2.msra.mxu0 0.0
        %2336 = vmatprep.subr.mxu0 0.0
        %2337 = vmatpush2.msra.mxu0 0.0
        %2338 = vmatprep.subr.mxu0 0.0
        %2339 = vmatpush2.msra.mxu0 0.0
        %2340 = vmatprep.subr.mxu0 0.0
        %2341 = vmatpush2.msra.mxu0 0.0
        %2342 = vmatprep.subr.mxu0 0.0
        %2343 = vmatpush2.msra.mxu0 0.0
        %2344 = vmatprep.subr.mxu0 0.0
        %2345 = vmatpush2.msra.mxu0 0.0
        %2346 = vmatprep.subr.mxu0 0.0
        %2347 = vmatpush2.msra.mxu0 0.0
        %2348 = vmatprep.subr.mxu0 0.0
        %2349 = vmatpush2.msra.mxu0 0.0
        %2350 = vmatprep.subr.mxu0 0.0
        %2351 = vmatpush2.msra.mxu0 0.0
        %2352 = vmatprep.subr.mxu0 0.0
        %2353 = vmatpush2.msra.mxu0 0.0
        %2354 = vmatprep.subr.mxu0 0.0
        %2355 = vmatpush2.msra.mxu0 0.0
        %2356 = vmatprep.subr.mxu0 0.0
        %2357 = vmatpush2.msra.mxu0 0.0
        %2358 = vmatprep.subr.mxu0 0.0
        %2359 = vmatpush2.msra.mxu0 0.0
        %2360 = vmatprep.subr.mxu0 0.0
        %2361 = vmatpush2.msra.mxu0 0.0
        %2362 = vmatprep.subr.mxu0 0.0
        %2363 = vmatpush2.msra.mxu0 0.0
        %2364 = vmatprep.mubr.f32.mxu0 0.0
        %2365 = vmatmul.mubr.f32.gmra.mxu0 %v2298
        %v2366 = vpop.f32.mrf.mxu0
        %v2367 = vadd.f32 0.0, %v2366
        %v2368 = vpop.f32.mrf.mxu0
        %2369 = vdwg.mxu0
        %v2370 = vadd.f32 %v2148, %v2221
        %v2371 = vadd.f32 %v2370, %v2294
        %v2372 = vadd.f32 %v2371, %v2367
        %v2373 = vlaneseq
        %v2374 = vshrl.u32 %v2373, 7
        %v2375 = vsub.s32 0, %v2374
        %v2376 = vrot.slane %v302, %v2375
        %v2377 = vadd.f32 %v2372, %v2376
        %v2378 = vadd.f32 %v2377, %v301
        %2379 = vadd.xlane.f32.xlu0 %v2378
        %v2380 = vpop.xlane.xlu0 %2379
        %v2381 = vmul.f32 %v2380, 0.03125
        %v2382 = vsub.f32 %v2378, %v2381
        %v2383 = vmul.f32 %v2382, %v2382
        %v2384 = vmul.f32 %v2383, %v308
        %2385 = vadd.xlane.f32.xlu0 %v2384
        %v2386 = vpop.xlane.xlu0 %2385
        %v2387 = vmul.f32 %v2386, 0.03125
        %v2388 = vadd.f32 %v2387, 1e-05
        %v2389 = vrsqrt.pop %v2388
        %v2390 = vmul.f32 %v2382, %v2389
        %v2391 = vlaneseq
        %v2392 = vshrl.u32 %v2391, 7
        %v2393 = vsub.s32 2, %v2392
        %v2394 = vrot.slane %v302, %v2393
        %v2395 = vmul.f32 %v2390, %v2394
        %v2396 = vlaneseq
        %v2397 = vshrl.u32 %v2396, 7
        %v2398 = vsub.s32 3, %v2397
        %v2399 = vrot.slane %v302, %v2398
        %v2400 = vadd.f32 %v2395, %v2399
        %v2401 = vld [vmem:[%s4] sm:$0xff]
        %v2402 = vld [vmem:[%s4 + $0x8] sm:$0xff]
        %v2403 = vld [vmem:[%s4 + $0x10] sm:$0xff]
        %v2404 = vld [vmem:[%s4 + $0x18] sm:$0xff]
        %v2405 = vld [vmem:[%s4 + $0x20] sm:$0xff]
        %v2406 = vld [vmem:[%s4 + $0x28] sm:$0xff]
        %v2407 = vld [vmem:[%s4 + $0x30] sm:$0xff]
        %v2408 = vld [vmem:[%s4 + $0x38] sm:$0xff]
        %v2409 = vld [vmem:[%s4 + $0x40] sm:$0xff]
        %v2410 = vld [vmem:[%s4 + $0x48] sm:$0xff]
        %v2411 = vld [vmem:[%s4 + $0x50] sm:$0xff]
        %v2412 = vld [vmem:[%s4 + $0x58] sm:$0xff]
        %v2413 = vld [vmem:[%s4 + $0x60] sm:$0xff]
        %v2414 = vld [vmem:[%s4 + $0x68] sm:$0xff]
        %v2415 = vld [vmem:[%s4 + $0x70] sm:$0xff]
        %v2416 = vld [vmem:[%s4 + $0x78] sm:$0xff]
        %v2418 = vlaneseq
        %v2419 = vshrl.u32 %v2418, 7
        %v2420 = vsub.s32 0, %v2419
        %v2421 = vrot.slane %v303, %v2420
        %2423 = vmatprep.subr.mxu0 0.0
        %2424 = vmatpush1.msra.mxu0 %v2416
        %2425 = vmatprep.subr.mxu0 0.0
        %2426 = vmatpush1.msra.mxu0 %v2415
        %2427 = vmatprep.subr.mxu0 0.0
        %2428 = vmatpush1.msra.mxu0 %v2414
        %2429 = vmatprep.subr.mxu0 0.0
        %2430 = vmatpush1.msra.mxu0 %v2413
        %2431 = vmatprep.subr.mxu0 0.0
        %2432 = vmatpush1.msra.mxu0 %v2412
        %2433 = vmatprep.subr.mxu0 0.0
        %2434 = vmatpush1.msra.mxu0 %v2411
        %2435 = vmatprep.subr.mxu0 0.0
        %2436 = vmatpush1.msra.mxu0 %v2410
        %2437 = vmatprep.subr.mxu0 0.0
        %2438 = vmatpush1.msra.mxu0 %v2409
        %2439 = vmatprep.subr.mxu0 0.0
        %2440 = vmatpush1.msra.mxu0 %v2408
        %2441 = vmatprep.subr.mxu0 0.0
        %2442 = vmatpush1.msra.mxu0 %v2407
        %2443 = vmatprep.subr.mxu0 0.0
        %2444 = vmatpush1.msra.mxu0 %v2406
        %2445 = vmatprep.subr.mxu0 0.0
        %2446 = vmatpush1.msra.mxu0 %v2405
        %2447 = vmatprep.subr.mxu0 0.0
        %2448 = vmatpush1.msra.mxu0 %v2404
        %2449 = vmatprep.subr.mxu0 0.0
        %2450 = vmatpush1.msra.mxu0 %v2403
        %2451 = vmatprep.subr.mxu0 0.0
        %2452 = vmatpush1.msra.mxu0 %v2402
        %2453 = vmatprep.subr.mxu0 0.0
        %2454 = vmatpush1.msra.mxu0 %v2401
        %2455 = vmatprep.subr.mxu0 0.0
        %2456 = vmatpush2.msra.mxu0 0.0
        %2457 = vmatprep.subr.mxu0 0.0
        %2458 = vmatpush2.msra.mxu0 0.0
        %2459 = vmatprep.subr.mxu0 0.0
        %2460 = vmatpush2.msra.mxu0 0.0
        %2461 = vmatprep.subr.mxu0 0.0
        %2462 = vmatpush2.msra.mxu0 0.0
        %2463 = vmatprep.subr.mxu0 0.0
        %2464 = vmatpush2.msra.mxu0 0.0
        %2465 = vmatprep.subr.mxu0 0.0
        %2466 = vmatpush2.msra.mxu0 0.0
        %2467 = vmatprep.subr.mxu0 0.0
        %2468 = vmatpush2.msra.mxu0 0.0
        %2469 = vmatprep.subr.mxu0 0.0
        %2470 = vmatpush2.msra.mxu0 0.0
        %2471 = vmatprep.subr.mxu0 0.0
        %2472 = vmatpush2.msra.mxu0 0.0
        %2473 = vmatprep.subr.mxu0 0.0
        %2474 = vmatpush2.msra.mxu0 0.0
        %2475 = vmatprep.subr.mxu0 0.0
        %2476 = vmatpush2.msra.mxu0 0.0
        %2477 = vmatprep.subr.mxu0 0.0
        %2478 = vmatpush2.msra.mxu0 0.0
        %2479 = vmatprep.subr.mxu0 0.0
        %2480 = vmatpush2.msra.mxu0 0.0
        %2481 = vmatprep.subr.mxu0 0.0
        %2482 = vmatpush2.msra.mxu0 0.0
        %2483 = vmatprep.subr.mxu0 0.0
        %2484 = vmatpush2.msra.mxu0 0.0
        %2485 = vmatprep.subr.mxu0 0.0
        %2486 = vmatpush2.msra.mxu0 0.0
        %2487 = vmatprep.mubr.f32.mxu0 0.0
        %2488 = vmatmul.mubr.f32.gmra.mxu0 %v2400
        %v2489 = vpop.f32.mrf.mxu0
        %v2490 = vadd.f32 %v2421, %v2489
        %v2491 = vpop.f32.mrf.mxu0
        %2492 = vdwg.mxu0
        %v2493 = vmax.f32 %v2490, 0.0
        %v2494 = vld [vmem:[%s6] sm:$0xff]
        %v2495 = vld [vmem:[%s6 + $0x8] sm:$0xff]
        %v2496 = vld [vmem:[%s6 + $0x10] sm:$0xff]
        %v2497 = vld [vmem:[%s6 + $0x18] sm:$0xff]
        %v2498 = vld [vmem:[%s6 + $0x20] sm:$0xff]
        %v2499 = vld [vmem:[%s6 + $0x28] sm:$0xff]
        %v2500 = vld [vmem:[%s6 + $0x30] sm:$0xff]
        %v2501 = vld [vmem:[%s6 + $0x38] sm:$0xff]
        %v2502 = vlaneseq
        %v2503 = vshrl.u32 %v2502, 7
        %v2504 = vsub.s32 1, %v2503
        %v2505 = vrot.slane %v302, %v2504
        %vm2506 = vcmask 523264
        %v2508 = vsel %vm2506, %v2493, 0
        %2510 = vmatprep.subr.mxu0 0.0
        %2511 = vmatpush1.msra.mxu0 0.0
        %2512 = vmatprep.subr.mxu0 0.0
        %2513 = vmatpush1.msra.mxu0 0.0
        %2514 = vmatprep.subr.mxu0 0.0
        %2515 = vmatpush1.msra.mxu0 0.0
        %2516 = vmatprep.subr.mxu0 0.0
        %2517 = vmatpush1.msra.mxu0 0.0
        %2518 = vmatprep.subr.mxu0 0.0
        %2519 = vmatpush1.msra.mxu0 0.0
        %2520 = vmatprep.subr.mxu0 0.0
        %2521 = vmatpush1.msra.mxu0 0.0
        %2522 = vmatprep.subr.mxu0 0.0
        %2523 = vmatpush1.msra.mxu0 0.0
        %2524 = vmatprep.subr.mxu0 0.0
        %2525 = vmatpush1.msra.mxu0 0.0
        %2526 = vmatprep.subr.mxu0 0.0
        %2527 = vmatpush1.msra.mxu0 %v2501
        %2528 = vmatprep.subr.mxu0 0.0
        %2529 = vmatpush1.msra.mxu0 %v2500
        %2530 = vmatprep.subr.mxu0 0.0
        %2531 = vmatpush1.msra.mxu0 %v2499
        %2532 = vmatprep.subr.mxu0 0.0
        %2533 = vmatpush1.msra.mxu0 %v2498
        %2534 = vmatprep.subr.mxu0 0.0
        %2535 = vmatpush1.msra.mxu0 %v2497
        %2536 = vmatprep.subr.mxu0 0.0
        %2537 = vmatpush1.msra.mxu0 %v2496
        %2538 = vmatprep.subr.mxu0 0.0
        %2539 = vmatpush1.msra.mxu0 %v2495
        %2540 = vmatprep.subr.mxu0 0.0
        %2541 = vmatpush1.msra.mxu0 %v2494
        %2542 = vmatprep.subr.mxu0 0.0
        %2543 = vmatpush2.msra.mxu0 0.0
        %2544 = vmatprep.subr.mxu0 0.0
        %2545 = vmatpush2.msra.mxu0 0.0
        %2546 = vmatprep.subr.mxu0 0.0
        %2547 = vmatpush2.msra.mxu0 0.0
        %2548 = vmatprep.subr.mxu0 0.0
        %2549 = vmatpush2.msra.mxu0 0.0
        %2550 = vmatprep.subr.mxu0 0.0
        %2551 = vmatpush2.msra.mxu0 0.0
        %2552 = vmatprep.subr.mxu0 0.0
        %2553 = vmatpush2.msra.mxu0 0.0
        %2554 = vmatprep.subr.mxu0 0.0
        %2555 = vmatpush2.msra.mxu0 0.0
        %2556 = vmatprep.subr.mxu0 0.0
        %2557 = vmatpush2.msra.mxu0 0.0
        %2558 = vmatprep.subr.mxu0 0.0
        %2559 = vmatpush2.msra.mxu0 0.0
        %2560 = vmatprep.subr.mxu0 0.0
        %2561 = vmatpush2.msra.mxu0 0.0
        %2562 = vmatprep.subr.mxu0 0.0
        %2563 = vmatpush2.msra.mxu0 0.0
        %2564 = vmatprep.subr.mxu0 0.0
        %2565 = vmatpush2.msra.mxu0 0.0
        %2566 = vmatprep.subr.mxu0 0.0
        %2567 = vmatpush2.msra.mxu0 0.0
        %2568 = vmatprep.subr.mxu0 0.0
        %2569 = vmatpush2.msra.mxu0 0.0
        %2570 = vmatprep.subr.mxu0 0.0
        %2571 = vmatpush2.msra.mxu0 0.0
        %2572 = vmatprep.subr.mxu0 0.0
        %2573 = vmatpush2.msra.mxu0 0.0
        %2574 = vmatprep.mubr.f32.mxu0 0.0
        %2575 = vmatmul.mubr.f32.gmra.mxu0 %v2508
        %v2576 = vpop.f32.mrf.mxu0
        %v2577 = vadd.f32 %v2505, %v2576
        %v2578 = vpop.f32.mrf.mxu0
        %2579 = vdwg.mxu0
        %v2580 = vadd.f32 %v2577, %v2400
        %2581 = vadd.xlane.f32.xlu0 %v2580
        %v2582 = vpop.xlane.xlu0 %2581
        %v2583 = vmul.f32 %v2582, 0.03125
        %v2584 = vsub.f32 %v2580, %v2583
        %v2585 = vmul.f32 %v2584, %v2584
        %v2586 = vmul.f32 %v2585, %v308
        %2587 = vadd.xlane.f32.xlu0 %v2586
        %v2588 = vpop.xlane.xlu0 %2587
        %v2589 = vmul.f32 %v2588, 0.03125
        %v2590 = vadd.f32 %v2589, 1e-05
        %v2591 = vrsqrt.pop %v2590
        %v2592 = vmul.f32 %v2584, %v2591
        %v2593 = vmul.f32 %v2592, %v2394
        %v2594 = vadd.f32 %v2593, %v2399
        %2595 = vst [vmem:[%s296] sm:$0xff] %v2594
        %s2596 = sand.u32 %s203, 1
        %s2597 = scalar_lea.sflag [#allocation3], %s2596
        %s2598 = sand.u32 %s203, 1
        %s2599 = smul.addr %s2598, 8
        %s2600 = scalar_lea.vmem [#allocation2], %s2599
        // Predicated region
        $region53: #{tpu_custom_call.1} parent=51 // pred_check
          %p2601 = pneg %p213
        $region54: #{tpu_custom_call.1} parent=51 // pred_check_branch
          %2603 = sbr.rel (%p2601) target = $region56
        $region55: #{tpu_custom_call.1} parent=51 // pred_region
          %s2605 = ssub.s32 128, 128
          %2606 = vsyncadd %s2597, %s2605
          %s2607 = smul.addr %s22, 128
          %s2608 = scalar_lea.hbm %s8, %s2607
          %s2610 = sshll.u32 %s2600, 4
          %s2611 = int_to_ptr.vmem [resolvable:$true] %s2610
          %2613 = dma.vmem_to_hbm [thread:$0]  %s2611, 128, %s2608, %s2597
        $region56: #{tpu_custom_call.1} parent=51 // pred_fallthru
          _
      $region52: #{tpu_custom_call.1} parent=5 // pred_fallthru
        _
      %p2614 = scmp.le.s32.totalorder 2, %s17
      // Predicated region
      $region57: #{tpu_custom_call.1} parent=5 // pred_check
        %p2615 = pneg %p2614
      $region58: #{tpu_custom_call.1} parent=5 // pred_check_branch
        %2617 = sbr.rel (%p2615) target = $region60
      $region59: #{tpu_custom_call.1} parent=5 // pred_region
        %s2618 = ssub.s32 %s17, 2
        // Predicated region
        $region61: #{tpu_custom_call.1} parent=59 // pred_check
          %p2619 = pneg %p219
        $region62: #{tpu_custom_call.1} parent=59 // pred_check_branch
          %2621 = sbr.rel (%p2619) target = $region64
        $region63: #{tpu_custom_call.1} parent=59 // pred_region
          %s2622 = sand.u32 %s204, 1
          %s2623 = scalar_lea.sflag [#allocation3], %s2622
          %s2624 = sand.u32 %s204, 1
          %s2625 = smul.addr %s2624, 8
          %s2626 = scalar_lea.vmem [#allocation2], %s2625
          %2627 = dma.done %s2623, 128
        $region64: #{tpu_custom_call.1} parent=59 // pred_fallthru
          _
      $region60: #{tpu_custom_call.1} parent=5 // pred_fallthru
        _
    $region6: #{tpu_custom_call.1} parent=1 // loop_footer
      %s21 = sadd.s32 1, %s17
    $region7: #{tpu_custom_call.1} parent=1 // loop_footer_branch
      %16 = sbr.rel target = $region3
    $region8: #{tpu_custom_call.1} parent=1 // loop_exit
      _
    %2628 = vsyncpa [#allocation3], 1
    %s2629 = scalar_lea.sflag [#allocation3], 1
    %2630 = vsyncpa %s2629, 1

</llo_original>
